<compile_context>
chip_gen: v7x
topology: tpu7x:2x2x1
jax: 0.10.0
libtpu: 0.0.40
codegen_flags: <defaults>
</compile_context>

<pallas_src>
import functools

import jax
import jax.numpy as jnp
from jax.experimental import pallas as pl
from jax.experimental.pallas import tpu as pltpu


def _round_up(a: int, m: int) -> int:
    return ((a + m - 1) // m) * m


def _pick_batch_block(N: int, max_nb: int = 8) -> int:
    """Images per grid step: amortize per-step overhead while keeping the
    grid length >= 2 so both v7x TensorCores get work."""
    best = 1
    for nb in range(1, min(N // 2, max_nb) + 1):
        if N % nb == 0:
            best = nb
    return best


def _pad_flat(img, Wrow, top, bottom):
    """(Hh, Wv, C) value -> ((Hh+top+bottom)*Wrow, C) flat padded slab.

    The image is placed at rows [top, top+Hh), cols [1, 1+Wv); the left halo
    column, right columns and top/bottom halo rows are zero, so shifted tap
    slices of the flat slab read correct zero padding (and only ever junk in
    columns that are dropped at the end)."""
    Hh, Wv, C = img.shape
    assert Wrow >= Wv + 2
    pieces = [jnp.zeros((Hh, 1, C), img.dtype), img]
    right = Wrow - Wv - 1
    if right:
        pieces.append(jnp.zeros((Hh, right, C), img.dtype))
    rows = jnp.concatenate(pieces, axis=1)                  # (Hh, Wrow, C)
    pieces = []
    if top:
        pieces.append(jnp.zeros((top, Wrow, C), img.dtype))
    pieces.append(rows)
    if bottom:
        pieces.append(jnp.zeros((bottom, Wrow, C), img.dtype))
    slab = jnp.concatenate(pieces, axis=0)                  # (Hh+top+bot, Wrow, C)
    return slab.reshape((Hh + top + bottom) * Wrow, C)


def _tap_matmuls(taps, L, row_block=256):
    """sum_t slab_t[off_t + q, :] @ w_t   for acc rows q in [0, L).

    `taps` is a list of (flat_slab_value, row_offset, (K, Cout) weight).
    Accumulation is chunked into `row_block` acc rows so the f32 accumulator
    stays small (bounds vreg pressure / spills on the 32x32 layers)."""
    chunks = []
    for start in range(0, L, row_block):
        size = min(row_block, L - start)
        acc = None
        for slab, off, w in taps:
            part = jnp.dot(slab[off + start:off + start + size, :], w,
                           preferred_element_type=jnp.float32)
            acc = part if acc is None else acc + part
        chunks.append(acc)
    return chunks[0] if len(chunks) == 1 else jnp.concatenate(chunks, axis=0)


# ----------------------------------------------------------------------------
# Fused BasicBlock kernel
# ----------------------------------------------------------------------------
def _basic_block_kernel(x_ref, w1_ref, b1_ref, w2_ref, b2_ref, o_ref, *,
                        stride, H, W, in_planes, planes):
    """One grid step = Nb images of the whole BasicBlock.

    stride == 1:  x_ref (Nb, H, W, Cin)        w1_ref (9, Cin, P)
    stride == 2:  x_ref (Nb, H, W/2, 2*Cin)    w1_ref (6, 2*Cin, P)
                  (column pairs merged into channels by the wrapper reshape)
    w2_ref (9, P, P);  b1/b2 (1, P) f32;  o_ref (Nb, Ho, Wo, P)."""
    Nb = x_ref.shape[0]
    Cin, P = in_planes, planes
    Ho, Wo = H // stride, W // stride

    Wrow2 = _round_up(Wo + 2, 8)
    L2 = Ho * Wrow2

    b1 = b1_ref[...]                                  # (1, P) f32
    b2 = b2_ref[...]
    w1 = [w1_ref[t] for t in range(w1_ref.shape[0])]  # bf16 tap matrices
    w2 = [w2_ref[t] for t in range(9)]

    for b in range(Nb):
        # ---------------- conv1 (+ shortcut prep) ----------------
        if stride == 1:
            x_b = x_ref[b]                            # (H, W, Cin) f32
            Wrow1 = _round_up(W + 2, 8)
            L1 = H * Wrow1
            slab1 = _pad_flat(x_b.astype(jnp.bfloat16), Wrow1, top=1, bottom=2)
            # static proof that every tap slice stays inside the slab
            assert 2 * Wrow1 + 2 + L1 <= slab1.shape[0]
            taps1 = [(slab1, dy * Wrow1 + dx, w1[3 * dy + dx])
                     for dy in range(3) for dx in range(3)]
            shortcut = x_b                            # identity (Cin == P), f32
        else:
            xm = x_ref[b]                             # (H, W/2, 2*Cin) f32
            Wp = W // 2
            xr = xm.reshape(H // 2, 2, Wp, 2 * Cin)   # split rows by parity
            r_even = xr[:, 0]                         # x rows 0,2,...  (Ho, Wp, 2Cin)
            r_odd = xr[:, 1]                          # x rows 1,3,...
            # option-'A' shortcut: x[::2, ::2, :] zero-padded to P channels (f32)
            pad = (P - Cin) // 2
            zc = jnp.zeros((Ho, Wo, pad), jnp.float32)
            shortcut = jnp.concatenate([zc, r_even[:, :, :Cin], zc], axis=-1)
            # flat row-parity slabs with pair-merged channels, bf16
            Wrow1 = _round_up(Wp + 2, 8)
            L1 = Ho * Wrow1
            slab_e = _pad_flat(r_even.astype(jnp.bfloat16), Wrow1, top=1, bottom=1)
            slab_o = _pad_flat(r_odd.astype(jnp.bfloat16), Wrow1, top=1, bottom=1)
            assert Wrow1 + 1 + L1 <= slab_e.shape[0]
            # 6 taps: (row parity, row shift sy) x (pair shift sx); the three
            # dx taps per dy are pre-packed into (2*Cin, P) weight blocks.
            taps1 = []
            for dy, (slab, sy) in enumerate(((slab_o, -1), (slab_e, 0), (slab_o, 0))):
                for j, sx in enumerate((-1, 0)):
                    off = (sy + 1) * Wrow1 + (sx + 1)
                    taps1.append((slab, off, w1[2 * dy + j]))

        # conv1 + bn1 (bias only; scale folded) + relu -> (Ho, Wo, P) bf16
        acc1 = _tap_matmuls(taps1, L1)
        y = jnp.maximum(acc1 + b1, 0.0)
        y = y.reshape(Ho, Wrow1, P)[:, :Wo, :].astype(jnp.bfloat16)

        # ---------------- conv2 + bn2 + shortcut + relu ----------------
        slab2 = _pad_flat(y, Wrow2, top=1, bottom=2)   # fresh zero halo in VMEM
        assert 2 * Wrow2 + 2 + L2 <= slab2.shape[0]
        taps2 = [(slab2, dy * Wrow2 + dx, w2[3 * dy + dx])
                 for dy in range(3) for dx in range(3)]
        acc2 = _tap_matmuls(taps2, L2)

        out = acc2.reshape(Ho, Wrow2, P)[:, :Wo, :] + b2 + shortcut
        o_ref[b] = jnp.maximum(out, 0.0).astype(o_ref.dtype)


# ----------------------------------------------------------------------------
# BasicBlock module (parameters initialized deterministically in-script)
# ----------------------------------------------------------------------------
class BasicBlockPallas:
    expansion = 1

    def __init__(self, key, in_planes, planes, stride=1, option='A'):
        # TODO(synk): option 'B' (1x1 conv + BN shortcut) not wired up.
        assert option == 'A'
        assert stride in (1, 2)
        if stride == 1:
            assert in_planes == planes          # identity shortcut
        else:
            # option-'A' ::2 subsample + channel pad must match the conv path
            assert in_planes + 2 * (planes // 4) == planes
        self.in_planes, self.planes, self.stride = in_planes, planes, stride
        eps = 1e-5

        ks = jax.random.split(key, 10)
        self.w1 = 0.1 * jax.random.normal(ks[0], (3, 3, in_planes, planes),
                                          jnp.float32)
        self.w2 = 0.1 * jax.random.normal(ks[1], (3, 3, planes, planes),
                                          jnp.float32)

        def make_bn(kg, kb, km, kv):
            gamma = 1.0 + 0.1 * jax.random.normal(kg, (planes,), jnp.float32)
            beta = 0.1 * jax.random.normal(kb, (planes,), jnp.float32)
            mean = 0.1 * jax.random.normal(km, (planes,), jnp.float32)
            var = jax.random.uniform(kv, (planes,), jnp.float32, 0.5, 1.5)
            scale = gamma * jax.lax.rsqrt(var + eps)
            return scale, beta - mean * scale

        self.scale1, self.bias1 = make_bn(ks[2], ks[3], ks[4], ks[5])
        self.scale2, self.bias2 = make_bn(ks[6], ks[7], ks[8], ks[9])

        # Fold BN scale into the conv weights and pre-pack per tap as clean
        # (K, Cout) bf16 matmul operands (the kernel only adds the bias).
        w1f = self.w1 * self.scale1                       # (3,3,Cin,P)
        if stride == 1:
            self.w1_packed = w1f.reshape(9, in_planes, planes).astype(jnp.bfloat16)
        else:
            # column pairs merged into channels -> per dy, two (2*Cin, P) blocks:
            #   j=0 (pair xo-1): [0 ; w[dy,0]]      j=1 (pair xo): [w[dy,1] ; w[dy,2]]
            z = jnp.zeros((in_planes, planes), jnp.float32)
            blocks = []
            for dy in range(3):
                blocks.append(jnp.concatenate([z, w1f[dy, 0]], axis=0))
                blocks.append(jnp.concatenate([w1f[dy, 1], w1f[dy, 2]], axis=0))
            self.w1_packed = jnp.stack(blocks, axis=0).astype(jnp.bfloat16)
        self.w2_packed = (self.w2 * self.scale2).reshape(
            9, planes, planes).astype(jnp.bfloat16)
        self.b1_packed = self.bias1.reshape(1, planes).astype(jnp.float32)
        self.b2_packed = self.bias2.reshape(1, planes).astype(jnp.float32)

    def __call__(self, x):
        """x: (N, H, W, in_planes) NHWC float32 -> (N, H/s, W/s, planes)."""
        N, H, W, Cin = x.shape
        assert Cin == self.in_planes
        s, P = self.stride, self.planes
        if s == 2:
            assert H % 2 == 0 and W % 2 == 0
            # free layout trick: merge column pairs into channels so the
            # kernel's stride-2 taps are unit-stride slices (no strided loads)
            x_in = x.reshape(N, H, W // 2, 2 * Cin)
        else:
            x_in = x
        Ho, Wo = H // s, W // s

        Nb = _pick_batch_block(N)
        grid = (N // Nb,)

        kernel = functools.partial(_basic_block_kernel, stride=s, H=H, W=W,
                                   in_planes=Cin, planes=P)
        in_specs = [
            pl.BlockSpec((Nb,) + x_in.shape[1:], lambda n: (n, 0, 0, 0)),
            pl.BlockSpec(self.w1_packed.shape, lambda n: (0, 0, 0)),
            pl.BlockSpec((1, P), lambda n: (0, 0)),
            pl.BlockSpec(self.w2_packed.shape, lambda n: (0, 0, 0)),
            pl.BlockSpec((1, P), lambda n: (0, 0)),
        ]
        return pl.pallas_call(
            kernel,
            out_shape=jax.ShapeDtypeStruct((N, Ho, Wo, P), jnp.float32),
            grid=grid,
            in_specs=in_specs,
            out_specs=pl.BlockSpec((Nb, Ho, Wo, P), lambda n: (n, 0, 0, 0)),
            compiler_params=pltpu.CompilerParams(
                dimension_semantics=("parallel",),
                # well under the v7x 64 MiB physical VMEM (v5e/v6e have 128 MiB)
                vmem_limit_bytes=48 * 1024 * 1024),
        )(x_in, self.w1_packed, self.b1_packed, self.w2_packed, self.b2_packed)


# ----------------------------------------------------------------------------
# Pure-JAX reference (f32, XLA conv) for correctness checking
# ----------------------------------------------------------------------------
def _ref_block_forward(block, x):
    dn = ("NHWC", "HWIO", "NHWC")
    out = jax.lax.conv_general_dilated(
        x, block.w1, (block.stride, block.stride), ((1, 1), (1, 1)),
        dimension_numbers=dn)
    out = jnp.maximum(out * block.scale1 + block.bias1, 0.0)
    out = jax.lax.conv_general_dilated(
        out, block.w2, (1, 1), ((1, 1), (1, 1)), dimension_numbers=dn)
    out = out * block.scale2 + block.bias2
    if block.stride != 1 or block.in_planes != block.planes:
        sc = x[:, ::2, ::2, :]
        p = block.planes // 4
        sc = jnp.pad(sc, ((0, 0), (0, 0), (0, 0), (p, p)))
    else:
        sc = x
    return jnp.maximum(out + sc, 0.0)


# ----------------------------------------------------------------------------
if __name__ == "__main__":
    key = jax.random.PRNGKey(0)
    kx, kp1, kp2 = jax.random.split(key, 3)

    # small config exercising the option-A (downsampling) path
    N, in_planes, H, W = 2, 4, 16, 16
    planes, stride = 8, 2

    x_nchw = jax.random.normal(kx, (N, in_planes, H, W), jnp.float32)
    x = jnp.transpose(x_nchw, (0, 2, 3, 1))  # NCHW -> NHWC

    # block 1: downsampling block (stride 2, option-'A' shortcut)
    blk1 = BasicBlockPallas(kp1, in_planes, planes, stride=stride, option='A')
    # block 2: identity block (stride 1, in_planes == planes)
    blk2 = BasicBlockPallas(kp2, planes, planes, stride=1, option='A')

    out1 = jax.block_until_ready(jax.jit(blk1.__call__)(x))
    assert out1.shape == (N, H // stride, W // stride, planes), out1.shape
    assert bool(jnp.all(jnp.isfinite(out1)))
    ref1 = _ref_block_forward(blk1, x)
    err1 = float(jnp.max(jnp.abs(out1 - ref1) / (1.0 + jnp.abs(ref1))))
    assert err1 < 0.1, err1

    x2 = ref1  # fresh f32 input for the identity block
    out2 = jax.block_until_ready(jax.jit(blk2.__call__)(x2))
    assert out2.shape == x2.shape, out2.shape
    assert bool(jnp.all(jnp.isfinite(out2)))
    ref2 = _ref_block_forward(blk2, x2)
    err2 = float(jnp.max(jnp.abs(out2 - ref2) / (1.0 + jnp.abs(ref2))))
    assert err2 < 0.1, err2

    print("KERNEL_OK")
</pallas_src>

<mosaic_0001>
module attributes {stable_mosaic.version = 11 : i64} {
  func.func @_basic_block_kernel(%arg0: i32, %arg1: memref<1x16x8x8xf32, #tpu.memory_space<vmem>>, %arg2: memref<6x8x8xbf16, #tpu.memory_space<vmem>>, %arg3: memref<1x8xf32, #tpu.memory_space<vmem>>, %arg4: memref<9x8x8xbf16, #tpu.memory_space<vmem>>, %arg5: memref<1x8xf32, #tpu.memory_space<vmem>>, %arg6: memref<1x8x8x8xf32, #tpu.memory_space<vmem>>) attributes {dimension_semantics = [#tpu.dimension_semantics<parallel>], iteration_bounds = array<i64: 2>, scalar_prefetch = 0 : i64, scratch_operands = 0 : i64, tpu.core_type = #tpu.core_type<tc>, window_params = [{transform_indices = @transform_0, window_bounds = array<i64: 1, 16, 8, 8>}, {pipeline_mode = #tpu.pipeline_mode<synchronous>, transform_indices = @transform_1, window_bounds = array<i64: 6, 8, 8>}, {pipeline_mode = #tpu.pipeline_mode<synchronous>, transform_indices = @transform_2, window_bounds = array<i64: 1, 8>}, {pipeline_mode = #tpu.pipeline_mode<synchronous>, transform_indices = @transform_3, window_bounds = array<i64: 9, 8, 8>}, {pipeline_mode = #tpu.pipeline_mode<synchronous>, transform_indices = @transform_4, window_bounds = array<i64: 1, 8>}, {transform_indices = @transform_5, window_bounds = array<i64: 1, 8, 8, 8>}]} {
    %c0 = arith.constant 0 : index
    %c0_0 = arith.constant 0 : index
    %0 = vector.load %arg3[%c0, %c0_0] : memref<1x8xf32, #tpu.memory_space<vmem>>, vector<1x8xf32>
    %c0_1 = arith.constant 0 : index
    %c0_2 = arith.constant 0 : index
    %1 = vector.load %arg5[%c0_1, %c0_2] : memref<1x8xf32, #tpu.memory_space<vmem>>, vector<1x8xf32>
    %c0_3 = arith.constant 0 : index
    %c0_4 = arith.constant 0 : index
    %c0_5 = arith.constant 0 : index
    %2 = vector.load %arg2[%c0_3, %c0_4, %c0_5] : memref<6x8x8xbf16, #tpu.memory_space<vmem>>, vector<1x8x8xbf16>
    %3 = vector.shape_cast %2 : vector<1x8x8xbf16> to vector<8x8xbf16>
    %c1 = arith.constant 1 : index
    %c0_6 = arith.constant 0 : index
    %c0_7 = arith.constant 0 : index
    %4 = vector.load %arg2[%c1, %c0_6, %c0_7] : memref<6x8x8xbf16, #tpu.memory_space<vmem>>, vector<1x8x8xbf16>
    %5 = vector.shape_cast %4 : vector<1x8x8xbf16> to vector<8x8xbf16>
    %c2 = arith.constant 2 : index
    %c0_8 = arith.constant 0 : index
    %c0_9 = arith.constant 0 : index
    %6 = vector.load %arg2[%c2, %c0_8, %c0_9] : memref<6x8x8xbf16, #tpu.memory_space<vmem>>, vector<1x8x8xbf16>
    %7 = vector.shape_cast %6 : vector<1x8x8xbf16> to vector<8x8xbf16>
    %c3 = arith.constant 3 : index
    %c0_10 = arith.constant 0 : index
    %c0_11 = arith.constant 0 : index
    %8 = vector.load %arg2[%c3, %c0_10, %c0_11] : memref<6x8x8xbf16, #tpu.memory_space<vmem>>, vector<1x8x8xbf16>
    %9 = vector.shape_cast %8 : vector<1x8x8xbf16> to vector<8x8xbf16>
    %c4 = arith.constant 4 : index
    %c0_12 = arith.constant 0 : index
    %c0_13 = arith.constant 0 : index
    %10 = vector.load %arg2[%c4, %c0_12, %c0_13] : memref<6x8x8xbf16, #tpu.memory_space<vmem>>, vector<1x8x8xbf16>
    %11 = vector.shape_cast %10 : vector<1x8x8xbf16> to vector<8x8xbf16>
    %c5 = arith.constant 5 : index
    %c0_14 = arith.constant 0 : index
    %c0_15 = arith.constant 0 : index
    %12 = vector.load %arg2[%c5, %c0_14, %c0_15] : memref<6x8x8xbf16, #tpu.memory_space<vmem>>, vector<1x8x8xbf16>
    %13 = vector.shape_cast %12 : vector<1x8x8xbf16> to vector<8x8xbf16>
    %c0_16 = arith.constant 0 : index
    %c0_17 = arith.constant 0 : index
    %c0_18 = arith.constant 0 : index
    %14 = vector.load %arg4[%c0_16, %c0_17, %c0_18] : memref<9x8x8xbf16, #tpu.memory_space<vmem>>, vector<1x8x8xbf16>
    %15 = vector.shape_cast %14 : vector<1x8x8xbf16> to vector<8x8xbf16>
    %c1_19 = arith.constant 1 : index
    %c0_20 = arith.constant 0 : index
    %c0_21 = arith.constant 0 : index
    %16 = vector.load %arg4[%c1_19, %c0_20, %c0_21] : memref<9x8x8xbf16, #tpu.memory_space<vmem>>, vector<1x8x8xbf16>
    %17 = vector.shape_cast %16 : vector<1x8x8xbf16> to vector<8x8xbf16>
    %c2_22 = arith.constant 2 : index
    %c0_23 = arith.constant 0 : index
    %c0_24 = arith.constant 0 : index
    %18 = vector.load %arg4[%c2_22, %c0_23, %c0_24] : memref<9x8x8xbf16, #tpu.memory_space<vmem>>, vector<1x8x8xbf16>
    %19 = vector.shape_cast %18 : vector<1x8x8xbf16> to vector<8x8xbf16>
    %c3_25 = arith.constant 3 : index
    %c0_26 = arith.constant 0 : index
    %c0_27 = arith.constant 0 : index
    %20 = vector.load %arg4[%c3_25, %c0_26, %c0_27] : memref<9x8x8xbf16, #tpu.memory_space<vmem>>, vector<1x8x8xbf16>
    %21 = vector.shape_cast %20 : vector<1x8x8xbf16> to vector<8x8xbf16>
    %c4_28 = arith.constant 4 : index
    %c0_29 = arith.constant 0 : index
    %c0_30 = arith.constant 0 : index
    %22 = vector.load %arg4[%c4_28, %c0_29, %c0_30] : memref<9x8x8xbf16, #tpu.memory_space<vmem>>, vector<1x8x8xbf16>
    %23 = vector.shape_cast %22 : vector<1x8x8xbf16> to vector<8x8xbf16>
    %c5_31 = arith.constant 5 : index
    %c0_32 = arith.constant 0 : index
    %c0_33 = arith.constant 0 : index
    %24 = vector.load %arg4[%c5_31, %c0_32, %c0_33] : memref<9x8x8xbf16, #tpu.memory_space<vmem>>, vector<1x8x8xbf16>
    %25 = vector.shape_cast %24 : vector<1x8x8xbf16> to vector<8x8xbf16>
    %c6 = arith.constant 6 : index
    %c0_34 = arith.constant 0 : index
    %c0_35 = arith.constant 0 : index
    %26 = vector.load %arg4[%c6, %c0_34, %c0_35] : memref<9x8x8xbf16, #tpu.memory_space<vmem>>, vector<1x8x8xbf16>
    %27 = vector.shape_cast %26 : vector<1x8x8xbf16> to vector<8x8xbf16>
    %c7 = arith.constant 7 : index
    %c0_36 = arith.constant 0 : index
    %c0_37 = arith.constant 0 : index
    %28 = vector.load %arg4[%c7, %c0_36, %c0_37] : memref<9x8x8xbf16, #tpu.memory_space<vmem>>, vector<1x8x8xbf16>
    %29 = vector.shape_cast %28 : vector<1x8x8xbf16> to vector<8x8xbf16>
    %c8 = arith.constant 8 : index
    %c0_38 = arith.constant 0 : index
    %c0_39 = arith.constant 0 : index
    %30 = vector.load %arg4[%c8, %c0_38, %c0_39] : memref<9x8x8xbf16, #tpu.memory_space<vmem>>, vector<1x8x8xbf16>
    %31 = vector.shape_cast %30 : vector<1x8x8xbf16> to vector<8x8xbf16>
    %c0_40 = arith.constant 0 : index
    %c0_41 = arith.constant 0 : index
    %c0_42 = arith.constant 0 : index
    %c0_43 = arith.constant 0 : index
    %32 = vector.load %arg1[%c0_40, %c0_41, %c0_42, %c0_43] : memref<1x16x8x8xf32, #tpu.memory_space<vmem>>, vector<1x16x8x8xf32>
    %33 = vector.shape_cast %32 : vector<1x16x8x8xf32> to vector<16x8x8xf32>
    %34 = vector.shape_cast %33 : vector<16x8x8xf32> to vector<8x2x8x8xf32>
    %35 = vector.extract_strided_slice %34 {offsets = [0, 0, 0, 0], sizes = [8, 1, 8, 8], strides = [1, 1, 1, 1]} : vector<8x2x8x8xf32> to vector<8x1x8x8xf32>
    %36 = vector.shape_cast %35 : vector<8x1x8x8xf32> to vector<8x8x8xf32>
    %37 = vector.extract_strided_slice %34 {offsets = [0, 1, 0, 0], sizes = [8, 1, 8, 8], strides = [1, 1, 1, 1]} : vector<8x2x8x8xf32> to vector<8x1x8x8xf32>
    %38 = vector.shape_cast %37 : vector<8x1x8x8xf32> to vector<8x8x8xf32>
    %cst = arith.constant 0.000000e+00 : f32
    %39 = vector.broadcast %cst : f32 to vector<8x8x2xf32>
    %40 = vector.extract_strided_slice %36 {offsets = [0, 0, 0], sizes = [8, 8, 4], strides = [1, 1, 1]} : vector<8x8x8xf32> to vector<8x8x4xf32>
    %41 = tpu.concatenate %39, %40, %39 in 2 : vector<8x8x2xf32>, vector<8x8x4xf32>, vector<8x8x2xf32> -> vector<8x8x8xf32>
    %42 = arith.truncf %36 : vector<8x8x8xf32> to vector<8x8x8xbf16>
    %cst_44 = arith.constant 0.000000e+00 : bf16
    %43 = vector.broadcast %cst_44 : bf16 to vector<8x1x8xbf16>
    %cst_45 = arith.constant 0.000000e+00 : bf16
    %44 = vector.broadcast %cst_45 : bf16 to vector<8x7x8xbf16>
    %45 = tpu.concatenate %43, %42, %44 in 1 : vector<8x1x8xbf16>, vector<8x8x8xbf16>, vector<8x7x8xbf16> -> vector<8x16x8xbf16>
    %cst_46 = arith.constant 0.000000e+00 : bf16
    %46 = vector.broadcast %cst_46 : bf16 to vector<1x16x8xbf16>
    %cst_47 = arith.constant 0.000000e+00 : bf16
    %47 = vector.broadcast %cst_47 : bf16 to vector<1x16x8xbf16>
    %48 = tpu.concatenate %46, %45, %47 in 0 : vector<1x16x8xbf16>, vector<8x16x8xbf16>, vector<1x16x8xbf16> -> vector<10x16x8xbf16>
    %49 = vector.shape_cast %48 : vector<10x16x8xbf16> to vector<160x8xbf16>
    %50 = arith.truncf %38 : vector<8x8x8xf32> to vector<8x8x8xbf16>
    %cst_48 = arith.constant 0.000000e+00 : bf16
    %51 = vector.broadcast %cst_48 : bf16 to vector<8x1x8xbf16>
    %cst_49 = arith.constant 0.000000e+00 : bf16
    %52 = vector.broadcast %cst_49 : bf16 to vector<8x7x8xbf16>
    %53 = tpu.concatenate %51, %50, %52 in 1 : vector<8x1x8xbf16>, vector<8x8x8xbf16>, vector<8x7x8xbf16> -> vector<8x16x8xbf16>
    %cst_50 = arith.constant 0.000000e+00 : bf16
    %54 = vector.broadcast %cst_50 : bf16 to vector<1x16x8xbf16>
    %cst_51 = arith.constant 0.000000e+00 : bf16
    %55 = vector.broadcast %cst_51 : bf16 to vector<1x16x8xbf16>
    %56 = tpu.concatenate %54, %53, %55 in 0 : vector<1x16x8xbf16>, vector<8x16x8xbf16>, vector<1x16x8xbf16> -> vector<10x16x8xbf16>
    %57 = vector.shape_cast %56 : vector<10x16x8xbf16> to vector<160x8xbf16>
    %58 = vector.extract_strided_slice %57 {offsets = [0, 0], sizes = [128, 8], strides = [1, 1]} : vector<160x8xbf16> to vector<128x8xbf16>
    %cst_52 = arith.constant dense<0.000000e+00> : vector<128x8xf32>
    %59 = tpu.matmul %58, %3, %cst_52 {dimension_numbers = #tpu.dot_dimension_numbers<[1], [0], [0], [1], [0, 0, 1, 1], [], []>} : vector<128x8xbf16>, vector<8x8xbf16>, vector<128x8xf32> -> vector<128x8xf32>
    %60 = vector.extract_strided_slice %57 {offsets = [1, 0], sizes = [128, 8], strides = [1, 1]} : vector<160x8xbf16> to vector<128x8xbf16>
    %cst_53 = arith.constant dense<0.000000e+00> : vector<128x8xf32>
    %61 = tpu.matmul %60, %5, %cst_53 {dimension_numbers = #tpu.dot_dimension_numbers<[1], [0], [0], [1], [0, 0, 1, 1], [], []>} : vector<128x8xbf16>, vector<8x8xbf16>, vector<128x8xf32> -> vector<128x8xf32>
    %62 = arith.addf %59, %61 : vector<128x8xf32>
    %63 = vector.extract_strided_slice %49 {offsets = [16, 0], sizes = [128, 8], strides = [1, 1]} : vector<160x8xbf16> to vector<128x8xbf16>
    %cst_54 = arith.constant dense<0.000000e+00> : vector<128x8xf32>
    %64 = tpu.matmul %63, %7, %cst_54 {dimension_numbers = #tpu.dot_dimension_numbers<[1], [0], [0], [1], [0, 0, 1, 1], [], []>} : vector<128x8xbf16>, vector<8x8xbf16>, vector<128x8xf32> -> vector<128x8xf32>
    %65 = arith.addf %62, %64 : vector<128x8xf32>
    %66 = vector.extract_strided_slice %49 {offsets = [17, 0], sizes = [128, 8], strides = [1, 1]} : vector<160x8xbf16> to vector<128x8xbf16>
    %cst_55 = arith.constant dense<0.000000e+00> : vector<128x8xf32>
    %67 = tpu.matmul %66, %9, %cst_55 {dimension_numbers = #tpu.dot_dimension_numbers<[1], [0], [0], [1], [0, 0, 1, 1], [], []>} : vector<128x8xbf16>, vector<8x8xbf16>, vector<128x8xf32> -> vector<128x8xf32>
    %68 = arith.addf %65, %67 : vector<128x8xf32>
    %69 = vector.extract_strided_slice %57 {offsets = [16, 0], sizes = [128, 8], strides = [1, 1]} : vector<160x8xbf16> to vector<128x8xbf16>
    %cst_56 = arith.constant dense<0.000000e+00> : vector<128x8xf32>
    %70 = tpu.matmul %69, %11, %cst_56 {dimension_numbers = #tpu.dot_dimension_numbers<[1], [0], [0], [1], [0, 0, 1, 1], [], []>} : vector<128x8xbf16>, vector<8x8xbf16>, vector<128x8xf32> -> vector<128x8xf32>
    %71 = arith.addf %68, %70 : vector<128x8xf32>
    %72 = vector.extract_strided_slice %57 {offsets = [17, 0], sizes = [128, 8], strides = [1, 1]} : vector<160x8xbf16> to vector<128x8xbf16>
    %cst_57 = arith.constant dense<0.000000e+00> : vector<128x8xf32>
    %73 = tpu.matmul %72, %13, %cst_57 {dimension_numbers = #tpu.dot_dimension_numbers<[1], [0], [0], [1], [0, 0, 1, 1], [], []>} : vector<128x8xbf16>, vector<8x8xbf16>, vector<128x8xf32> -> vector<128x8xf32>
    %74 = arith.addf %71, %73 : vector<128x8xf32>
    %75 = vector.broadcast %0 : vector<1x8xf32> to vector<128x8xf32>
    %76 = arith.addf %74, %75 : vector<128x8xf32>
    %cst_58 = arith.constant 0.000000e+00 : f32
    %77 = vector.broadcast %cst_58 : f32 to vector<128x8xf32>
    %78 = arith.maximumf %76, %77 : vector<128x8xf32>
    %79 = vector.shape_cast %78 : vector<128x8xf32> to vector<8x16x8xf32>
    %80 = vector.extract_strided_slice %79 {offsets = [0, 0, 0], sizes = [8, 8, 8], strides = [1, 1, 1]} : vector<8x16x8xf32> to vector<8x8x8xf32>
    %81 = arith.truncf %80 : vector<8x8x8xf32> to vector<8x8x8xbf16>
    %cst_59 = arith.constant 0.000000e+00 : bf16
    %82 = vector.broadcast %cst_59 : bf16 to vector<8x1x8xbf16>
    %cst_60 = arith.constant 0.000000e+00 : bf16
    %83 = vector.broadcast %cst_60 : bf16 to vector<8x7x8xbf16>
    %84 = tpu.concatenate %82, %81, %83 in 1 : vector<8x1x8xbf16>, vector<8x8x8xbf16>, vector<8x7x8xbf16> -> vector<8x16x8xbf16>
    %cst_61 = arith.constant 0.000000e+00 : bf16
    %85 = vector.broadcast %cst_61 : bf16 to vector<1x16x8xbf16>
    %cst_62 = arith.constant 0.000000e+00 : bf16
    %86 = vector.broadcast %cst_62 : bf16 to vector<2x16x8xbf16>
    %87 = tpu.concatenate %85, %84, %86 in 0 : vector<1x16x8xbf16>, vector<8x16x8xbf16>, vector<2x16x8xbf16> -> vector<11x16x8xbf16>
    %88 = vector.shape_cast %87 : vector<11x16x8xbf16> to vector<176x8xbf16>
    %89 = vector.extract_strided_slice %88 {offsets = [0, 0], sizes = [128, 8], strides = [1, 1]} : vector<176x8xbf16> to vector<128x8xbf16>
    %cst_63 = arith.constant dense<0.000000e+00> : vector<128x8xf32>
    %90 = tpu.matmul %89, %15, %cst_63 {dimension_numbers = #tpu.dot_dimension_numbers<[1], [0], [0], [1], [0, 0, 1, 1], [], []>} : vector<128x8xbf16>, vector<8x8xbf16>, vector<128x8xf32> -> vector<128x8xf32>
    %91 = vector.extract_strided_slice %88 {offsets = [1, 0], sizes = [128, 8], strides = [1, 1]} : vector<176x8xbf16> to vector<128x8xbf16>
    %cst_64 = arith.constant dense<0.000000e+00> : vector<128x8xf32>
    %92 = tpu.matmul %91, %17, %cst_64 {dimension_numbers = #tpu.dot_dimension_numbers<[1], [0], [0], [1], [0, 0, 1, 1], [], []>} : vector<128x8xbf16>, vector<8x8xbf16>, vector<128x8xf32> -> vector<128x8xf32>
    %93 = arith.addf %90, %92 : vector<128x8xf32>
    %94 = vector.extract_strided_slice %88 {offsets = [2, 0], sizes = [128, 8], strides = [1, 1]} : vector<176x8xbf16> to vector<128x8xbf16>
    %cst_65 = arith.constant dense<0.000000e+00> : vector<128x8xf32>
    %95 = tpu.matmul %94, %19, %cst_65 {dimension_numbers = #tpu.dot_dimension_numbers<[1], [0], [0], [1], [0, 0, 1, 1], [], []>} : vector<128x8xbf16>, vector<8x8xbf16>, vector<128x8xf32> -> vector<128x8xf32>
    %96 = arith.addf %93, %95 : vector<128x8xf32>
    %97 = vector.extract_strided_slice %88 {offsets = [16, 0], sizes = [128, 8], strides = [1, 1]} : vector<176x8xbf16> to vector<128x8xbf16>
    %cst_66 = arith.constant dense<0.000000e+00> : vector<128x8xf32>
    %98 = tpu.matmul %97, %21, %cst_66 {dimension_numbers = #tpu.dot_dimension_numbers<[1], [0], [0], [1], [0, 0, 1, 1], [], []>} : vector<128x8xbf16>, vector<8x8xbf16>, vector<128x8xf32> -> vector<128x8xf32>
    %99 = arith.addf %96, %98 : vector<128x8xf32>
    %100 = vector.extract_strided_slice %88 {offsets = [17, 0], sizes = [128, 8], strides = [1, 1]} : vector<176x8xbf16> to vector<128x8xbf16>
    %cst_67 = arith.constant dense<0.000000e+00> : vector<128x8xf32>
    %101 = tpu.matmul %100, %23, %cst_67 {dimension_numbers = #tpu.dot_dimension_numbers<[1], [0], [0], [1], [0, 0, 1, 1], [], []>} : vector<128x8xbf16>, vector<8x8xbf16>, vector<128x8xf32> -> vector<128x8xf32>
    %102 = arith.addf %99, %101 : vector<128x8xf32>
    %103 = vector.extract_strided_slice %88 {offsets = [18, 0], sizes = [128, 8], strides = [1, 1]} : vector<176x8xbf16> to vector<128x8xbf16>
    %cst_68 = arith.constant dense<0.000000e+00> : vector<128x8xf32>
    %104 = tpu.matmul %103, %25, %cst_68 {dimension_numbers = #tpu.dot_dimension_numbers<[1], [0], [0], [1], [0, 0, 1, 1], [], []>} : vector<128x8xbf16>, vector<8x8xbf16>, vector<128x8xf32> -> vector<128x8xf32>
    %105 = arith.addf %102, %104 : vector<128x8xf32>
    %106 = vector.extract_strided_slice %88 {offsets = [32, 0], sizes = [128, 8], strides = [1, 1]} : vector<176x8xbf16> to vector<128x8xbf16>
    %cst_69 = arith.constant dense<0.000000e+00> : vector<128x8xf32>
    %107 = tpu.matmul %106, %27, %cst_69 {dimension_numbers = #tpu.dot_dimension_numbers<[1], [0], [0], [1], [0, 0, 1, 1], [], []>} : vector<128x8xbf16>, vector<8x8xbf16>, vector<128x8xf32> -> vector<128x8xf32>
    %108 = arith.addf %105, %107 : vector<128x8xf32>
    %109 = vector.extract_strided_slice %88 {offsets = [33, 0], sizes = [128, 8], strides = [1, 1]} : vector<176x8xbf16> to vector<128x8xbf16>
    %cst_70 = arith.constant dense<0.000000e+00> : vector<128x8xf32>
    %110 = tpu.matmul %109, %29, %cst_70 {dimension_numbers = #tpu.dot_dimension_numbers<[1], [0], [0], [1], [0, 0, 1, 1], [], []>} : vector<128x8xbf16>, vector<8x8xbf16>, vector<128x8xf32> -> vector<128x8xf32>
    %111 = arith.addf %108, %110 : vector<128x8xf32>
    %112 = vector.extract_strided_slice %88 {offsets = [34, 0], sizes = [128, 8], strides = [1, 1]} : vector<176x8xbf16> to vector<128x8xbf16>
    %cst_71 = arith.constant dense<0.000000e+00> : vector<128x8xf32>
    %113 = tpu.matmul %112, %31, %cst_71 {dimension_numbers = #tpu.dot_dimension_numbers<[1], [0], [0], [1], [0, 0, 1, 1], [], []>} : vector<128x8xbf16>, vector<8x8xbf16>, vector<128x8xf32> -> vector<128x8xf32>
    %114 = arith.addf %111, %113 : vector<128x8xf32>
    %115 = vector.shape_cast %114 : vector<128x8xf32> to vector<8x16x8xf32>
    %116 = vector.extract_strided_slice %115 {offsets = [0, 0, 0], sizes = [8, 8, 8], strides = [1, 1, 1]} : vector<8x16x8xf32> to vector<8x8x8xf32>
    %117 = vector.shape_cast %1 : vector<1x8xf32> to vector<1x1x8xf32>
    %118 = vector.broadcast %117 : vector<1x1x8xf32> to vector<8x8x8xf32>
    %119 = arith.addf %116, %118 : vector<8x8x8xf32>
    %120 = arith.addf %119, %41 : vector<8x8x8xf32>
    %cst_72 = arith.constant 0.000000e+00 : f32
    %121 = vector.broadcast %cst_72 : f32 to vector<8x8x8xf32>
    %122 = arith.maximumf %120, %121 : vector<8x8x8xf32>
    %c0_73 = arith.constant 0 : index
    %c0_74 = arith.constant 0 : index
    %c0_75 = arith.constant 0 : index
    %c0_76 = arith.constant 0 : index
    %123 = vector.load %arg6[%c0_73, %c0_74, %c0_75, %c0_76] : memref<1x8x8x8xf32, #tpu.memory_space<vmem>>, vector<1x8x8x8xf32>
    %124 = vector.shape_cast %123 : vector<1x8x8x8xf32> to vector<8x8x8xf32>
    %125 = vector.shape_cast %122 : vector<8x8x8xf32> to vector<1x8x8x8xf32>
    tpu.vector_store %arg6[%c0_73, %c0_74, %c0_75, %c0_76], %125 {strides = array<i32>} : memref<1x8x8x8xf32, #tpu.memory_space<vmem>>, vector<1x8x8x8xf32>,
    return
  }
  func.func @transform_0(%arg0: i32) -> (i32, i32, i32, i32) {
    %c0_i32 = arith.constant 0 : i32
    %c0_i32_0 = arith.constant 0 : i32
    %c0_i32_1 = arith.constant 0 : i32
    %c0_i32_2 = arith.constant 0 : i32
    return %arg0, %c0_i32, %c0_i32_0, %c0_i32_1 : i32, i32, i32, i32
  }
  func.func @transform_1(%arg0: i32) -> (i32, i32, i32) {
    %c0_i32 = arith.constant 0 : i32
    %c0_i32_0 = arith.constant 0 : i32
    %c0_i32_1 = arith.constant 0 : i32
    %c0_i32_2 = arith.constant 0 : i32
    return %c0_i32, %c0_i32_0, %c0_i32_1 : i32, i32, i32
  }
  func.func @transform_2(%arg0: i32) -> (i32, i32) {
    %c0_i32 = arith.constant 0 : i32
    %c0_i32_0 = arith.constant 0 : i32
    %c0_i32_1 = arith.constant 0 : i32
    return %c0_i32, %c0_i32_0 : i32, i32
  }
  func.func @transform_3(%arg0: i32) -> (i32, i32, i32) {
    %c0_i32 = arith.constant 0 : i32
    %c0_i32_0 = arith.constant 0 : i32
    %c0_i32_1 = arith.constant 0 : i32
    %c0_i32_2 = arith.constant 0 : i32
    return %c0_i32, %c0_i32_0, %c0_i32_1 : i32, i32, i32
  }
  func.func @transform_4(%arg0: i32) -> (i32, i32) {
    %c0_i32 = arith.constant 0 : i32
    %c0_i32_0 = arith.constant 0 : i32
    %c0_i32_1 = arith.constant 0 : i32
    return %c0_i32, %c0_i32_0 : i32, i32
  }
  func.func @transform_5(%arg0: i32) -> (i32, i32, i32, i32) {
    %c0_i32 = arith.constant 0 : i32
    %c0_i32_0 = arith.constant 0 : i32
    %c0_i32_1 = arith.constant 0 : i32
    %c0_i32_2 = arith.constant 0 : i32
    return %arg0, %c0_i32, %c0_i32_0, %c0_i32_1 : i32, i32, i32, i32
  }
}

</mosaic_0001>

<llo_original>
// kernel: a_call__.1
$region0: #{a_call__.1}
  #allocation0 [shape = 'u32[]', space=smem, size = 0x4, offset = 0x4, fixed_abs, tag = 'smem constant byte address 0x4 - core index']
  #allocation1 [shape = 'u32[144,128]{1,0:T(1,128)}', space=vmem, size = 0x12000, scoped, tag = 'internal scratch']
  %s0 = inlined_call_operand.vmem [shape: f32[2,16,8,8], index: 0, kind: input, shape index: {}]
  %s1 = inlined_call_operand.vmem [shape: bf16[6,8,8], index: 1, kind: input, shape index: {}]
  %s2 = inlined_call_operand.vmem [shape: f32[1,8], index: 2, kind: input, shape index: {}]
  %s3 = inlined_call_operand.vmem [shape: bf16[9,8,8], index: 3, kind: input, shape index: {}]
  %s4 = inlined_call_operand.vmem [shape: f32[1,8], index: 4, kind: input, shape index: {}]
  %s5 = inlined_call_operand.hbm [shape: f32[2,8,8,8], index: 5, kind: output, shape index: {}]
  %s6 = sld [smem:[#allocation0]]
  $region53: #{a_call__.1} parent=0
    _
  %s8 = ssub.s32 1, %s6
  %s9 = scalar_select 0, %s8, %s6
  $region1: #{a_call__.1} parent=0
    #allocation2 [shape = 'u8[65536]{0}', space=vmem, size = 0x10000, scoped, tag = 'output window, operand 0']
    #allocation3 [shape = 's32[2]{0}', space=sflag, size = 0x8, scoped, tag = 'scoped memory for a_call__.1']
    %10 = vsyncpa [#allocation3], 0
    %s11 = scalar_lea.sflag [#allocation3], 1
    %12 = vsyncpa %s11, 0
    loop: start=0, step=1, limit=4
    $region2: #{a_call__.1} parent=1 // loop_pre_header
      _
    $region3: #{a_call__.1} parent=1 // loop_header
      %s14 = sphi 0, %s18
      %p15 = scmp.ge.s32.totalorder %s14, 4
      %s24 = sphi 0, %s26
      %s27 = sphi 0, %s24
      %s28 = sphi 0, %s27
      %s44 = sphi 0, %s28
      %s48 = sphi 0, %s48
      %s50 = sphi 0, %s48
      %s51 = sphi 0, %s50
      %s65 = sphi 0, %s51
      %s69 = sphi 0, %s69
      %s71 = sphi 0, %s69
      %s72 = sphi 0, %s71
      %s86 = sphi 0, %s72
      %s90 = sphi 0, %s90
      %s92 = sphi 0, %s90
      %s93 = sphi 0, %s92
      %s107 = sphi 0, %s93
      %s111 = sphi 0, %s111
      %s113 = sphi 0, %s111
      %s114 = sphi 0, %s113
      %s128 = sphi 0, %s114
      %s134 = sphi 0, %s136
      %s137 = sphi 0, %s134
      %s138 = sphi 0, %s137
      %s154 = sphi 0, %s138
    $region4: #{a_call__.1} parent=1 // loop_header_branch
      %17 = sbr.rel (%p15) target = $region8
    $region5: #{a_call__.1} parent=1 // loop_body
      %s19 = ssub.s32 %s14, 1
      %s20 = ssub.s32 %s14, 2
      %s21 = sadd.s32 %s14, 1
      %s22 = ssub.s32 %s14, %s21
      %p23 = scmp.eq.s32.totalorder %s22, 0
      %s25 = sadd.s32 %s24, 1
      %s26 = scalar_select %p23, %s24, %s25
      %p29 = pneg %p23
      %p30 = scmp.eq.s32.totalorder %s14, 1
      %p31 = por %p29, %p30
      %p32 = scmp.ne.s32.totalorder %s24, %s27
      %p33 = scmp.eq.s32.totalorder %s14, 0
      %p34 = por %p32, %p33
      %p35 = scmp.ne.s32.totalorder %s24, %s27
      %p36 = scmp.eq.s32.totalorder %s19, 1
      %p37 = por %p35, %p36
      %p38 = scmp.ne.s32.totalorder %s27, %s28
      %p39 = scmp.eq.s32.totalorder %s19, 0
      %p40 = por %p38, %p39
      %p41 = scmp.ne.s32.totalorder %s27, %s28
      %p42 = scmp.eq.s32.totalorder %s20, 1
      %p43 = por %p41, %p42
      %p45 = scmp.ne.s32.totalorder %s28, %s44
      %p46 = scmp.eq.s32.totalorder %s20, 0
      %p47 = por %p45, %p46
      %s49 = sadd.s32 %s48, 1
      %p52 = scmp.eq.s32.totalorder %s14, 1
      %p53 = scmp.ne.s32.totalorder %s48, %s50
      %p54 = scmp.eq.s32.totalorder %s14, 0
      %p55 = por %p53, %p54
      %p56 = scmp.ne.s32.totalorder %s48, %s50
      %p57 = scmp.eq.s32.totalorder %s19, 1
      %p58 = por %p56, %p57
      %p59 = scmp.ne.s32.totalorder %s50, %s51
      %p60 = scmp.eq.s32.totalorder %s19, 0
      %p61 = por %p59, %p60
      %p62 = scmp.ne.s32.totalorder %s50, %s51
      %p63 = scmp.eq.s32.totalorder %s20, 1
      %p64 = por %p62, %p63
      %p66 = scmp.ne.s32.totalorder %s51, %s65
      %p67 = scmp.eq.s32.totalorder %s20, 0
      %p68 = por %p66, %p67
      %s70 = sadd.s32 %s69, 1
      %p73 = scmp.eq.s32.totalorder %s14, 1
      %p74 = scmp.ne.s32.totalorder %s69, %s71
      %p75 = scmp.eq.s32.totalorder %s14, 0
      %p76 = por %p74, %p75
      %p77 = scmp.ne.s32.totalorder %s69, %s71
      %p78 = scmp.eq.s32.totalorder %s19, 1
      %p79 = por %p77, %p78
      %p80 = scmp.ne.s32.totalorder %s71, %s72
      %p81 = scmp.eq.s32.totalorder %s19, 0
      %p82 = por %p80, %p81
      %p83 = scmp.ne.s32.totalorder %s71, %s72
      %p84 = scmp.eq.s32.totalorder %s20, 1
      %p85 = por %p83, %p84
      %p87 = scmp.ne.s32.totalorder %s72, %s86
      %p88 = scmp.eq.s32.totalorder %s20, 0
      %p89 = por %p87, %p88
      %s91 = sadd.s32 %s90, 1
      %p94 = scmp.eq.s32.totalorder %s14, 1
      %p95 = scmp.ne.s32.totalorder %s90, %s92
      %p96 = scmp.eq.s32.totalorder %s14, 0
      %p97 = por %p95, %p96
      %p98 = scmp.ne.s32.totalorder %s90, %s92
      %p99 = scmp.eq.s32.totalorder %s19, 1
      %p100 = por %p98, %p99
      %p101 = scmp.ne.s32.totalorder %s92, %s93
      %p102 = scmp.eq.s32.totalorder %s19, 0
      %p103 = por %p101, %p102
      %p104 = scmp.ne.s32.totalorder %s92, %s93
      %p105 = scmp.eq.s32.totalorder %s20, 1
      %p106 = por %p104, %p105
      %p108 = scmp.ne.s32.totalorder %s93, %s107
      %p109 = scmp.eq.s32.totalorder %s20, 0
      %p110 = por %p108, %p109
      %s112 = sadd.s32 %s111, 1
      %p115 = scmp.eq.s32.totalorder %s14, 1
      %p116 = scmp.ne.s32.totalorder %s111, %s113
      %p117 = scmp.eq.s32.totalorder %s14, 0
      %p118 = por %p116, %p117
      %p119 = scmp.ne.s32.totalorder %s111, %s113
      %p120 = scmp.eq.s32.totalorder %s19, 1
      %p121 = por %p119, %p120
      %p122 = scmp.ne.s32.totalorder %s113, %s114
      %p123 = scmp.eq.s32.totalorder %s19, 0
      %p124 = por %p122, %p123
      %p125 = scmp.ne.s32.totalorder %s113, %s114
      %p126 = scmp.eq.s32.totalorder %s20, 1
      %p127 = por %p125, %p126
      %p129 = scmp.ne.s32.totalorder %s114, %s128
      %p130 = scmp.eq.s32.totalorder %s20, 0
      %p131 = por %p129, %p130
      %s132 = ssub.s32 %s14, %s21
      %p133 = scmp.eq.s32.totalorder %s132, 0
      %s135 = sadd.s32 %s134, 1
      %s136 = scalar_select %p133, %s134, %s135
      %p139 = pneg %p133
      %p140 = scmp.eq.s32.totalorder %s14, 1
      %p141 = por %p139, %p140
      %p142 = scmp.ne.s32.totalorder %s134, %s137
      %p143 = scmp.eq.s32.totalorder %s14, 0
      %p144 = por %p142, %p143
      %p145 = scmp.ne.s32.totalorder %s134, %s137
      %p146 = scmp.eq.s32.totalorder %s19, 1
      %p147 = por %p145, %p146
      %p148 = scmp.ne.s32.totalorder %s137, %s138
      %p149 = scmp.eq.s32.totalorder %s19, 0
      %p150 = por %p148, %p149
      %p151 = scmp.ne.s32.totalorder %s137, %s138
      %p152 = scmp.eq.s32.totalorder %s20, 1
      %p153 = por %p151, %p152
      %p155 = scmp.ne.s32.totalorder %s138, %s154
      %p156 = scmp.eq.s32.totalorder %s20, 0
      %p157 = por %p155, %p156
      %p158 = scmp.le.s32.totalorder 1, %s14
      %p159 = scmp.lt.s32.totalorder %s14, 3
      %p160 = pnand %p158, %p159
      %p161 = pneg %p160
      // Predicated region
      $region9: #{a_call__.1} parent=5 // pred_check
        _
      $region10: #{a_call__.1} parent=5 // pred_check_branch
        %163 = sbr.rel (%p160) target = $region12
      $region11: #{a_call__.1} parent=5 // pred_region
        %s164 = ssub.s32 %s14, 1
        // Predicated region
        $region13: #{a_call__.1} parent=11 // pred_check
          %p165 = pneg %p61
        $region14: #{a_call__.1} parent=11 // pred_check_branch
          %167 = sbr.rel (%p165) target = $region16
        $region15: #{a_call__.1} parent=11 // pred_region
          _
        $region16: #{a_call__.1} parent=11 // pred_fallthru
          _
        // Predicated region
        $region17: #{a_call__.1} parent=11 // pred_check
          %p168 = pneg %p82
        $region18: #{a_call__.1} parent=11 // pred_check_branch
          %170 = sbr.rel (%p168) target = $region20
        $region19: #{a_call__.1} parent=11 // pred_region
          _
        $region20: #{a_call__.1} parent=11 // pred_fallthru
          _
        // Predicated region
        $region21: #{a_call__.1} parent=11 // pred_check
          %p171 = pneg %p103
        $region22: #{a_call__.1} parent=11 // pred_check_branch
          %173 = sbr.rel (%p171) target = $region24
        $region23: #{a_call__.1} parent=11 // pred_region
          _
        $region24: #{a_call__.1} parent=11 // pred_fallthru
          _
        // Predicated region
        $region25: #{a_call__.1} parent=11 // pred_check
          %p174 = pneg %p124
        $region26: #{a_call__.1} parent=11 // pred_check_branch
          %176 = sbr.rel (%p174) target = $region28
        $region27: #{a_call__.1} parent=11 // pred_region
          _
        $region28: #{a_call__.1} parent=11 // pred_fallthru
          _
      $region12: #{a_call__.1} parent=5 // pred_fallthru
        _
      %p177 = scmp.lt.s32.totalorder %s14, 2
      // Predicated region
      $region29: #{a_call__.1} parent=5 // pred_check
        %p178 = pneg %p177
      $region30: #{a_call__.1} parent=5 // pred_check_branch
        %180 = sbr.rel (%p178) target = $region32
      $region31: #{a_call__.1} parent=5 // pred_region
        // Predicated region
        $region33: #{a_call__.1} parent=31 // pred_check
          %p181 = pneg %p34
        $region34: #{a_call__.1} parent=31 // pred_check_branch
          %183 = sbr.rel (%p181) target = $region36
        $region35: #{a_call__.1} parent=31 // pred_region
          %p184 = scmp.lt.s32.totalorder %s14, 1
          %s185 = scalar_select %p184, %s14, 1
          %s186 = smul.addr %s185, 16
          %s187 = smul.addr %s186, 8
          %s188 = scalar_lea.vmem %s0, %s187
        $region36: #{a_call__.1} parent=31 // pred_fallthru
          _
      $region32: #{a_call__.1} parent=5 // pred_fallthru
        _
      %p189 = scmp.le.s32.totalorder 1, %s14
      %p190 = scmp.lt.s32.totalorder %s14, 3
      %p191 = pnand %p189, %p190
      %p192 = pneg %p191
      // Predicated region
      $region37: #{a_call__.1} parent=5 // pred_check
        _
      $region38: #{a_call__.1} parent=5 // pred_check_branch
        %194 = sbr.rel (%p191) target = $region40
      $region39: #{a_call__.1} parent=5 // pred_region
        %s195 = ssub.s32 %s14, 1
        %p196 = scmp.lt.s32.totalorder %s19, 1
        %s197 = scalar_select %p196, %s19, 1
        %s198 = smul.addr %s197, 16
        %s199 = smul.addr %s198, 8
        %s200 = scalar_lea.vmem %s0, %s199
        %p201 = pneg %p40
        %p202 = pneg %p37
        %p203 = pneg %p61
        %p204 = pneg %p58
        %p205 = pneg %p82
        %p206 = pneg %p79
        %p207 = pneg %p103
        %p208 = pneg %p100
        %p209 = pneg %p124
        %p210 = pneg %p121
        %p211 = pneg %p150
        %p212 = pneg %p147
        %s213 = sand.u32 %s137, 1
        %s214 = scalar_lea.sflag [#allocation3], %s213
        %s215 = sand.u32 %s137, 1
        %s216 = smul.addr %s215, 64
        %s217 = scalar_lea.vmem [#allocation2], %s216
        %p218 = scmp.lt.s32.totalorder %s19, 1
        %s219 = scalar_select %p218, %s19, 1
        %s220 = smul.addr %s219, 16
        %s221 = smul.addr %s220, 8
        %s222 = scalar_lea.vmem %s0, %s221
        %v224 = vld [vmem:[%s2] sm:$0x1]
        %v225 = vld [vmem:[%s4] sm:$0x1]
        %v226 = vld [vmem:[%s1] sm:$0xf]
        %s227 = scalar_lea.vmem %s1, 4
        %v228 = vld [vmem:[%s227] sm:$0xf]
        %s229 = scalar_lea.vmem %s1, 8
        %v230 = vld [vmem:[%s229] sm:$0xf]
        %s231 = scalar_lea.vmem %s1, 12
        %v232 = vld [vmem:[%s231] sm:$0xf]
        %s233 = scalar_lea.vmem %s1, 16
        %v234 = vld [vmem:[%s233] sm:$0xf]
        %s235 = scalar_lea.vmem %s1, 20
        %v236 = vld [vmem:[%s235] sm:$0xf]
        %v237 = vld [vmem:[%s3] sm:$0xf]
        %s238 = scalar_lea.vmem %s3, 4
        %v239 = vld [vmem:[%s238] sm:$0xf]
        %s240 = scalar_lea.vmem %s3, 8
        %v241 = vld [vmem:[%s240] sm:$0xf]
        %s242 = scalar_lea.vmem %s3, 12
        %v243 = vld [vmem:[%s242] sm:$0xf]
        %s244 = scalar_lea.vmem %s3, 16
        %v245 = vld [vmem:[%s244] sm:$0xf]
        %s246 = scalar_lea.vmem %s3, 20
        %v247 = vld [vmem:[%s246] sm:$0xf]
        %s248 = scalar_lea.vmem %s3, 24
        %v249 = vld [vmem:[%s248] sm:$0xf]
        %s250 = scalar_lea.vmem %s3, 28
        %v251 = vld [vmem:[%s250] sm:$0xf]
        %s252 = scalar_lea.vmem %s3, 32
        %v253 = vld [vmem:[%s252] sm:$0xf]
        %v254 = vld [vmem:[%s222] sm:$0xff]
        %v255 = vld [vmem:[%s222 + $0x8] sm:$0xff]
        %v256 = vld [vmem:[%s222 + $0x10] sm:$0xff]
        %v257 = vld [vmem:[%s222 + $0x18] sm:$0xff]
        %v258 = vld [vmem:[%s222 + $0x20] sm:$0xff]
        %v259 = vld [vmem:[%s222 + $0x28] sm:$0xff]
        %v260 = vld [vmem:[%s222 + $0x30] sm:$0xff]
        %v261 = vld [vmem:[%s222 + $0x38] sm:$0xff]
        %v262 = vld [vmem:[%s222 + $0x40] sm:$0xff]
        %v263 = vld [vmem:[%s222 + $0x48] sm:$0xff]
        %v264 = vld [vmem:[%s222 + $0x50] sm:$0xff]
        %v265 = vld [vmem:[%s222 + $0x58] sm:$0xff]
        %v266 = vld [vmem:[%s222 + $0x60] sm:$0xff]
        %v267 = vld [vmem:[%s222 + $0x68] sm:$0xff]
        %v268 = vld [vmem:[%s222 + $0x70] sm:$0xff]
        %v269 = vld [vmem:[%s222 + $0x78] sm:$0xff]
        %278 = vrot.lane.b32.xlu0 %v254, 2
        %v279 = vpop.permute.xlu0 %278
        %280 = vrot.lane.b32.xlu0 %v256, 2
        %v281 = vpop.permute.xlu0 %280
        %282 = vrot.lane.b32.xlu0 %v258, 2
        %v283 = vpop.permute.xlu0 %282
        %284 = vrot.lane.b32.xlu0 %v260, 2
        %v285 = vpop.permute.xlu0 %284
        %286 = vrot.lane.b32.xlu0 %v262, 2
        %v287 = vpop.permute.xlu0 %286
        %288 = vrot.lane.b32.xlu0 %v264, 2
        %v289 = vpop.permute.xlu0 %288
        %290 = vrot.lane.b32.xlu0 %v266, 2
        %v291 = vpop.permute.xlu0 %290
        %292 = vrot.lane.b32.xlu0 %v268, 2
        %v293 = vpop.permute.xlu0 %292
        %vm302 = vcmask 15360
        %v303 = vsel %vm302, 0.0, %v279
        %v304 = vsel %vm302, 0.0, %v281
        %v305 = vsel %vm302, 0.0, %v283
        %v306 = vsel %vm302, 0.0, %v285
        %v307 = vsel %vm302, 0.0, %v287
        %v308 = vsel %vm302, 0.0, %v289
        %v309 = vsel %vm302, 0.0, %v291
        %v310 = vsel %vm302, 0.0, %v293
        %vm311 = vcmask 48128
        %v312 = vsel %vm311, %v303, 0.0
        %v313 = vsel %vm311, %v304, 0.0
        %v314 = vsel %vm311, %v305, 0.0
        %v315 = vsel %vm311, %v306, 0.0
        %v316 = vsel %vm311, %v307, 0.0
        %v317 = vsel %vm311, %v308, 0.0
        %v318 = vsel %vm311, %v309, 0.0
        %v319 = vsel %vm311, %v310, 0.0
        %v320 = vpack.c.bf16 %v254, %v254
        %v321 = vpack.c.bf16 %v256, %v256
        %v322 = vpack.c.bf16 %v258, %v258
        %v323 = vpack.c.bf16 %v260, %v260
        %v324 = vpack.c.bf16 %v262, %v262
        %v325 = vpack.c.bf16 %v264, %v264
        %v326 = vpack.c.bf16 %v266, %v266
        %v327 = vpack.c.bf16 %v268, %v268
        %v329 = vshrl.u32 %v320, 16
        %v331 = vrot.slane %v329, 7
        %v332 = vshll.u32 %v320, 16
        %v334 = vor.u32 %v331, %v332
        %v336 = vshrl.u32 %v321, 16
        %v338 = vrot.slane %v336, 7
        %v339 = vshll.u32 %v321, 16
        %v341 = vor.u32 %v338, %v339
        %v343 = vshrl.u32 %v322, 16
        %v345 = vrot.slane %v343, 7
        %v346 = vshll.u32 %v322, 16
        %v348 = vor.u32 %v345, %v346
        %v350 = vshrl.u32 %v323, 16
        %v352 = vrot.slane %v350, 7
        %v353 = vshll.u32 %v323, 16
        %v355 = vor.u32 %v352, %v353
        %v357 = vshrl.u32 %v324, 16
        %v359 = vrot.slane %v357, 7
        %v360 = vshll.u32 %v324, 16
        %v362 = vor.u32 %v359, %v360
        %v364 = vshrl.u32 %v325, 16
        %v366 = vrot.slane %v364, 7
        %v367 = vshll.u32 %v325, 16
        %v369 = vor.u32 %v366, %v367
        %v371 = vshrl.u32 %v326, 16
        %v373 = vrot.slane %v371, 7
        %v374 = vshll.u32 %v326, 16
        %v376 = vor.u32 %v373, %v374
        %v378 = vshrl.u32 %v327, 16
        %v380 = vrot.slane %v378, 7
        %v381 = vshll.u32 %v327, 16
        %v383 = vor.u32 %v380, %v381
        %vm392 = vcmask 1040384
        %vm393 = vsmask.f32 256
        %vm394 = vmand %vm392, %vm393
        %v395 = vsel %vm394, 0, %v334
        %v396 = vsel %vm394, 0, %v341
        %v397 = vsel %vm394, 0, %v348
        %v398 = vsel %vm394, 0, %v355
        %v399 = vsel %vm394, 0, %v362
        %v400 = vsel %vm394, 0, %v369
        %v401 = vsel %vm394, 0, %v376
        %v402 = vsel %vm394, 0, %v383
        %vm403 = vcmask 1044480
        %vm404 = vsmask.f32 4352
        %vm405 = vmand %vm403, %vm404
        %v406 = vsel %vm405, %v395, 0
        %v407 = vsel %vm405, %v396, 0
        %v408 = vsel %vm405, %v397, 0
        %v409 = vsel %vm405, %v398, 0
        %v410 = vsel %vm405, %v399, 0
        %v411 = vsel %vm405, %v400, 0
        %v412 = vsel %vm405, %v401, 0
        %v413 = vsel %vm405, %v402, 0
        %v414 = vpack.c.bf16 %v255, %v255
        %v415 = vpack.c.bf16 %v257, %v257
        %v416 = vpack.c.bf16 %v259, %v259
        %v417 = vpack.c.bf16 %v261, %v261
        %v418 = vpack.c.bf16 %v263, %v263
        %v419 = vpack.c.bf16 %v265, %v265
        %v420 = vpack.c.bf16 %v267, %v267
        %v421 = vpack.c.bf16 %v269, %v269
        %v423 = vshrl.u32 %v414, 16
        %v425 = vrot.slane %v423, 7
        %v426 = vshll.u32 %v414, 16
        %v428 = vor.u32 %v425, %v426
        %v430 = vshrl.u32 %v415, 16
        %v432 = vrot.slane %v430, 7
        %v433 = vshll.u32 %v415, 16
        %v435 = vor.u32 %v432, %v433
        %v437 = vshrl.u32 %v416, 16
        %v439 = vrot.slane %v437, 7
        %v440 = vshll.u32 %v416, 16
        %v442 = vor.u32 %v439, %v440
        %v444 = vshrl.u32 %v417, 16
        %v446 = vrot.slane %v444, 7
        %v447 = vshll.u32 %v417, 16
        %v449 = vor.u32 %v446, %v447
        %v451 = vshrl.u32 %v418, 16
        %v453 = vrot.slane %v451, 7
        %v454 = vshll.u32 %v418, 16
        %v456 = vor.u32 %v453, %v454
        %v458 = vshrl.u32 %v419, 16
        %v460 = vrot.slane %v458, 7
        %v461 = vshll.u32 %v419, 16
        %v463 = vor.u32 %v460, %v461
        %v465 = vshrl.u32 %v420, 16
        %v467 = vrot.slane %v465, 7
        %v468 = vshll.u32 %v420, 16
        %v470 = vor.u32 %v467, %v468
        %v472 = vshrl.u32 %v421, 16
        %v474 = vrot.slane %v472, 7
        %v475 = vshll.u32 %v421, 16
        %v477 = vor.u32 %v474, %v475
        %v486 = vsel %vm394, 0, %v428
        %v487 = vsel %vm394, 0, %v435
        %v488 = vsel %vm394, 0, %v442
        %v489 = vsel %vm394, 0, %v449
        %v490 = vsel %vm394, 0, %v456
        %v491 = vsel %vm394, 0, %v463
        %v492 = vsel %vm394, 0, %v470
        %v493 = vsel %vm394, 0, %v477
        %v494 = vsel %vm405, %v486, 0
        %v495 = vsel %vm405, %v487, 0
        %v496 = vsel %vm405, %v488, 0
        %v497 = vsel %vm405, %v489, 0
        %v498 = vsel %vm405, %v490, 0
        %v499 = vsel %vm405, %v491, 0
        %v500 = vsel %vm405, %v492, 0
        %v501 = vsel %vm405, %v493, 0
        %vm502 = vsmask.f32 7424
        %v504 = vshrl.u32 0, 16
        %v506 = vshll.u32 0, 16
        %v508 = vrot.slane %v506, 1
        %v509 = vor.u32 %v504, %v508
        %v511 = vshll.u32 %v494, 16
        %v513 = vrot.slane %v511, 1
        %v514 = vsel %vm502, %v509, %v513
        %v515 = vshrl.u32 %v494, 16
        %v517 = vor.u32 %v515, %v513
        %v519 = vshll.u32 %v495, 16
        %v521 = vrot.slane %v519, 1
        %v522 = vsel %vm502, %v517, %v521
        %v523 = vshrl.u32 %v495, 16
        %v525 = vor.u32 %v523, %v521
        %v527 = vshll.u32 %v496, 16
        %v529 = vrot.slane %v527, 1
        %v530 = vsel %vm502, %v525, %v529
        %v531 = vshrl.u32 %v496, 16
        %v533 = vor.u32 %v531, %v529
        %v535 = vshll.u32 %v497, 16
        %v537 = vrot.slane %v535, 1
        %v538 = vsel %vm502, %v533, %v537
        %v539 = vshrl.u32 %v497, 16
        %v541 = vor.u32 %v539, %v537
        %v543 = vshll.u32 %v498, 16
        %v545 = vrot.slane %v543, 1
        %v546 = vsel %vm502, %v541, %v545
        %v547 = vshrl.u32 %v498, 16
        %v549 = vor.u32 %v547, %v545
        %v551 = vshll.u32 %v499, 16
        %v553 = vrot.slane %v551, 1
        %v554 = vsel %vm502, %v549, %v553
        %v555 = vshrl.u32 %v499, 16
        %v557 = vor.u32 %v555, %v553
        %v559 = vshll.u32 %v500, 16
        %v561 = vrot.slane %v559, 1
        %v562 = vsel %vm502, %v557, %v561
        %v563 = vshrl.u32 %v500, 16
        %v565 = vor.u32 %v563, %v561
        %v567 = vshll.u32 %v501, 16
        %v569 = vrot.slane %v567, 1
        %v570 = vsel %vm502, %v565, %v569
        %vm571 = vcmask 64512
        %v573 = vsel %vm571, %v514, 0
        %v576 = vsel %vm571, %v522, 0
        %v579 = vsel %vm571, %v530, 0
        %v582 = vsel %vm571, %v538, 0
        %v585 = vsel %vm571, %v546, 0
        %v588 = vsel %vm571, %v554, 0
        %v591 = vsel %vm571, %v562, 0
        %v594 = vsel %vm571, %v570, 0
        %vm596 = vcmask 1043456
        %v598 = vsel %vm596, %v228, 0
        %600 = vmatprep.subr.bf16.mxu0 0
        %601 = vmatpush1.bf16.msra.mxu0 %v598
        %602 = vmatprep.subr.bf16.mxu0 0
        %603 = vmatpush1.bf16.msra.mxu0 0
        %604 = vmatprep.subr.bf16.mxu0 0
        %605 = vmatpush1.bf16.msra.mxu0 0
        %606 = vmatprep.subr.bf16.mxu0 0
        %607 = vmatpush1.bf16.msra.mxu0 0
        %608 = vmatprep.subr.bf16.mxu0 0
        %609 = vmatpush1.bf16.msra.mxu0 0
        %610 = vmatprep.subr.bf16.mxu0 0
        %611 = vmatpush1.bf16.msra.mxu0 0
        %612 = vmatprep.subr.bf16.mxu0 0
        %613 = vmatpush1.bf16.msra.mxu0 0
        %614 = vmatprep.subr.bf16.mxu0 0
        %615 = vmatpush1.bf16.msra.mxu0 0
        %616 = vmatprep.subr.bf16.mxu0 0
        %617 = vmatpush1.bf16.msra.mxu0 0
        %618 = vmatprep.subr.bf16.mxu0 0
        %619 = vmatpush1.bf16.msra.mxu0 0
        %620 = vmatprep.subr.bf16.mxu0 0
        %621 = vmatpush1.bf16.msra.mxu0 0
        %622 = vmatprep.subr.bf16.mxu0 0
        %623 = vmatpush1.bf16.msra.mxu0 0
        %624 = vmatprep.subr.bf16.mxu0 0
        %625 = vmatpush1.bf16.msra.mxu0 0
        %626 = vmatprep.subr.bf16.mxu0 0
        %627 = vmatpush1.bf16.msra.mxu0 0
        %628 = vmatprep.subr.bf16.mxu0 0
        %629 = vmatpush1.bf16.msra.mxu0 0
        %630 = vmatprep.subr.bf16.mxu0 0
        %631 = vmatpush1.bf16.msra.mxu0 0
        %632 = vmatprep.mubr.bf16.mxu0 0
        %633 = vmatmul.mubr.bf16.gmra.mrb[0].mxu0 %v573
        %v634 = vpop.f32.mrb[0].mxu0
        %v635 = vadd.f32 0.0, %v634
        %v636 = vpop.f32.mrb[0].mxu0
        %v637 = vpop.f32.mrb[0].mxu0
        %v638 = vpop.f32.mrb[0].mxu0
        %639 = vmatprep.mubr.bf16.mxu0 0
        %640 = vmatmul.mubr.bf16.gmra.mrb[0].mxu0 %v576
        %v641 = vpop.f32.mrb[0].mxu0
        %v642 = vadd.f32 0.0, %v641
        %v643 = vpop.f32.mrb[0].mxu0
        %v644 = vpop.f32.mrb[0].mxu0
        %v645 = vpop.f32.mrb[0].mxu0
        %646 = vmatprep.mubr.bf16.mxu0 0
        %647 = vmatmul.mubr.bf16.gmra.mrb[0].mxu0 %v579
        %v648 = vpop.f32.mrb[0].mxu0
        %v649 = vadd.f32 0.0, %v648
        %v650 = vpop.f32.mrb[0].mxu0
        %v651 = vpop.f32.mrb[0].mxu0
        %v652 = vpop.f32.mrb[0].mxu0
        %653 = vmatprep.mubr.bf16.mxu0 0
        %654 = vmatmul.mubr.bf16.gmra.mrb[0].mxu0 %v582
        %v655 = vpop.f32.mrb[0].mxu0
        %v656 = vadd.f32 0.0, %v655
        %v657 = vpop.f32.mrb[0].mxu0
        %v658 = vpop.f32.mrb[0].mxu0
        %v659 = vpop.f32.mrb[0].mxu0
        %660 = vmatprep.mubr.bf16.mxu0 0
        %661 = vmatmul.mubr.bf16.gmra.mrb[0].mxu0 %v585
        %v662 = vpop.f32.mrb[0].mxu0
        %v663 = vadd.f32 0.0, %v662
        %v664 = vpop.f32.mrb[0].mxu0
        %v665 = vpop.f32.mrb[0].mxu0
        %v666 = vpop.f32.mrb[0].mxu0
        %667 = vmatprep.mubr.bf16.mxu0 0
        %668 = vmatmul.mubr.bf16.gmra.mrb[0].mxu0 %v588
        %v669 = vpop.f32.mrb[0].mxu0
        %v670 = vadd.f32 0.0, %v669
        %v671 = vpop.f32.mrb[0].mxu0
        %v672 = vpop.f32.mrb[0].mxu0
        %v673 = vpop.f32.mrb[0].mxu0
        %674 = vmatprep.mubr.bf16.mxu0 0
        %675 = vmatmul.mubr.bf16.gmra.mrb[0].mxu0 %v591
        %v676 = vpop.f32.mrb[0].mxu0
        %v677 = vadd.f32 0.0, %v676
        %v678 = vpop.f32.mrb[0].mxu0
        %v679 = vpop.f32.mrb[0].mxu0
        %v680 = vpop.f32.mrb[0].mxu0
        %681 = vmatprep.mubr.bf16.mxu0 0
        %682 = vmatmul.mubr.bf16.gmra.mrb[0].mxu0 %v594
        %v683 = vpop.f32.mrb[0].mxu0
        %v684 = vadd.f32 0.0, %v683
        %v685 = vpop.f32.mrb[0].mxu0
        %v686 = vpop.f32.mrb[0].mxu0
        %v687 = vpop.f32.mrb[0].mxu0
        %688 = vdwg.mxu0
        %v689 = vsel %vm571, 0, 0
        %v691 = vsel %vm571, %v494, 0
        %v693 = vsel %vm571, %v495, 0
        %v695 = vsel %vm571, %v496, 0
        %v697 = vsel %vm571, %v497, 0
        %v699 = vsel %vm571, %v498, 0
        %v701 = vsel %vm571, %v499, 0
        %v703 = vsel %vm571, %v500, 0
        %v706 = vsel %vm596, %v226, 0
        %708 = vmatprep.subr.bf16.mxu0 0
        %709 = vmatpush1.bf16.msra.mxu0 %v706
        %710 = vmatprep.subr.bf16.mxu0 0
        %711 = vmatpush1.bf16.msra.mxu0 0
        %712 = vmatprep.subr.bf16.mxu0 0
        %713 = vmatpush1.bf16.msra.mxu0 0
        %714 = vmatprep.subr.bf16.mxu0 0
        %715 = vmatpush1.bf16.msra.mxu0 0
        %716 = vmatprep.subr.bf16.mxu0 0
        %717 = vmatpush1.bf16.msra.mxu0 0
        %718 = vmatprep.subr.bf16.mxu0 0
        %719 = vmatpush1.bf16.msra.mxu0 0
        %720 = vmatprep.subr.bf16.mxu0 0
        %721 = vmatpush1.bf16.msra.mxu0 0
        %722 = vmatprep.subr.bf16.mxu0 0
        %723 = vmatpush1.bf16.msra.mxu0 0
        %724 = vmatprep.subr.bf16.mxu0 0
        %725 = vmatpush1.bf16.msra.mxu0 0
        %726 = vmatprep.subr.bf16.mxu0 0
        %727 = vmatpush1.bf16.msra.mxu0 0
        %728 = vmatprep.subr.bf16.mxu0 0
        %729 = vmatpush1.bf16.msra.mxu0 0
        %730 = vmatprep.subr.bf16.mxu0 0
        %731 = vmatpush1.bf16.msra.mxu0 0
        %732 = vmatprep.subr.bf16.mxu0 0
        %733 = vmatpush1.bf16.msra.mxu0 0
        %734 = vmatprep.subr.bf16.mxu0 0
        %735 = vmatpush1.bf16.msra.mxu0 0
        %736 = vmatprep.subr.bf16.mxu0 0
        %737 = vmatpush1.bf16.msra.mxu0 0
        %738 = vmatprep.subr.bf16.mxu0 0
        %739 = vmatpush1.bf16.msra.mxu0 0
        %740 = vmatprep.mubr.bf16.mxu0 0
        %741 = vmatmul.mubr.bf16.gmra.mrb[0].mxu0 %v689
        %v742 = vpop.f32.mrb[0].mxu0
        %v743 = vadd.f32 %v635, %v742
        %v744 = vpop.f32.mrb[0].mxu0
        %v745 = vpop.f32.mrb[0].mxu0
        %v746 = vpop.f32.mrb[0].mxu0
        %747 = vmatprep.mubr.bf16.mxu0 0
        %748 = vmatmul.mubr.bf16.gmra.mrb[0].mxu0 %v691
        %v749 = vpop.f32.mrb[0].mxu0
        %v750 = vadd.f32 %v642, %v749
        %v751 = vpop.f32.mrb[0].mxu0
        %v752 = vpop.f32.mrb[0].mxu0
        %v753 = vpop.f32.mrb[0].mxu0
        %754 = vmatprep.mubr.bf16.mxu0 0
        %755 = vmatmul.mubr.bf16.gmra.mrb[0].mxu0 %v693
        %v756 = vpop.f32.mrb[0].mxu0
        %v757 = vadd.f32 %v649, %v756
        %v758 = vpop.f32.mrb[0].mxu0
        %v759 = vpop.f32.mrb[0].mxu0
        %v760 = vpop.f32.mrb[0].mxu0
        %761 = vmatprep.mubr.bf16.mxu0 0
        %762 = vmatmul.mubr.bf16.gmra.mrb[0].mxu0 %v695
        %v763 = vpop.f32.mrb[0].mxu0
        %v764 = vadd.f32 %v656, %v763
        %v765 = vpop.f32.mrb[0].mxu0
        %v766 = vpop.f32.mrb[0].mxu0
        %v767 = vpop.f32.mrb[0].mxu0
        %768 = vmatprep.mubr.bf16.mxu0 0
        %769 = vmatmul.mubr.bf16.gmra.mrb[0].mxu0 %v697
        %v770 = vpop.f32.mrb[0].mxu0
        %v771 = vadd.f32 %v663, %v770
        %v772 = vpop.f32.mrb[0].mxu0
        %v773 = vpop.f32.mrb[0].mxu0
        %v774 = vpop.f32.mrb[0].mxu0
        %775 = vmatprep.mubr.bf16.mxu0 0
        %776 = vmatmul.mubr.bf16.gmra.mrb[0].mxu0 %v699
        %v777 = vpop.f32.mrb[0].mxu0
        %v778 = vadd.f32 %v670, %v777
        %v779 = vpop.f32.mrb[0].mxu0
        %v780 = vpop.f32.mrb[0].mxu0
        %v781 = vpop.f32.mrb[0].mxu0
        %782 = vmatprep.mubr.bf16.mxu0 0
        %783 = vmatmul.mubr.bf16.gmra.mrb[0].mxu0 %v701
        %v784 = vpop.f32.mrb[0].mxu0
        %v785 = vadd.f32 %v677, %v784
        %v786 = vpop.f32.mrb[0].mxu0
        %v787 = vpop.f32.mrb[0].mxu0
        %v788 = vpop.f32.mrb[0].mxu0
        %789 = vmatprep.mubr.bf16.mxu0 0
        %790 = vmatmul.mubr.bf16.gmra.mrb[0].mxu0 %v703
        %v791 = vpop.f32.mrb[0].mxu0
        %v792 = vadd.f32 %v684, %v791
        %v793 = vpop.f32.mrb[0].mxu0
        %v794 = vpop.f32.mrb[0].mxu0
        %v795 = vpop.f32.mrb[0].mxu0
        %796 = vdwg.mxu0
        %v798 = vsel %vm571, %v406, 0
        %v801 = vsel %vm571, %v407, 0
        %v804 = vsel %vm571, %v408, 0
        %v807 = vsel %vm571, %v409, 0
        %v810 = vsel %vm571, %v410, 0
        %v813 = vsel %vm571, %v411, 0
        %v816 = vsel %vm571, %v412, 0
        %v819 = vsel %vm571, %v413, 0
        %v822 = vsel %vm596, %v230, 0
        %824 = vmatprep.subr.bf16.mxu0 0
        %825 = vmatpush1.bf16.msra.mxu0 %v822
        %826 = vmatprep.subr.bf16.mxu0 0
        %827 = vmatpush1.bf16.msra.mxu0 0
        %828 = vmatprep.subr.bf16.mxu0 0
        %829 = vmatpush1.bf16.msra.mxu0 0
        %830 = vmatprep.subr.bf16.mxu0 0
        %831 = vmatpush1.bf16.msra.mxu0 0
        %832 = vmatprep.subr.bf16.mxu0 0
        %833 = vmatpush1.bf16.msra.mxu0 0
        %834 = vmatprep.subr.bf16.mxu0 0
        %835 = vmatpush1.bf16.msra.mxu0 0
        %836 = vmatprep.subr.bf16.mxu0 0
        %837 = vmatpush1.bf16.msra.mxu0 0
        %838 = vmatprep.subr.bf16.mxu0 0
        %839 = vmatpush1.bf16.msra.mxu0 0
        %840 = vmatprep.subr.bf16.mxu0 0
        %841 = vmatpush1.bf16.msra.mxu0 0
        %842 = vmatprep.subr.bf16.mxu0 0
        %843 = vmatpush1.bf16.msra.mxu0 0
        %844 = vmatprep.subr.bf16.mxu0 0
        %845 = vmatpush1.bf16.msra.mxu0 0
        %846 = vmatprep.subr.bf16.mxu0 0
        %847 = vmatpush1.bf16.msra.mxu0 0
        %848 = vmatprep.subr.bf16.mxu0 0
        %849 = vmatpush1.bf16.msra.mxu0 0
        %850 = vmatprep.subr.bf16.mxu0 0
        %851 = vmatpush1.bf16.msra.mxu0 0
        %852 = vmatprep.subr.bf16.mxu0 0
        %853 = vmatpush1.bf16.msra.mxu0 0
        %854 = vmatprep.subr.bf16.mxu0 0
        %855 = vmatpush1.bf16.msra.mxu0 0
        %856 = vmatprep.mubr.bf16.mxu0 0
        %857 = vmatmul.mubr.bf16.gmra.mrb[0].mxu0 %v798
        %v858 = vpop.f32.mrb[0].mxu0
        %v859 = vadd.f32 0.0, %v858
        %v860 = vpop.f32.mrb[0].mxu0
        %v861 = vpop.f32.mrb[0].mxu0
        %v862 = vpop.f32.mrb[0].mxu0
        %863 = vmatprep.mubr.bf16.mxu0 0
        %864 = vmatmul.mubr.bf16.gmra.mrb[0].mxu0 %v801
        %v865 = vpop.f32.mrb[0].mxu0
        %v866 = vadd.f32 0.0, %v865
        %v867 = vpop.f32.mrb[0].mxu0
        %v868 = vpop.f32.mrb[0].mxu0
        %v869 = vpop.f32.mrb[0].mxu0
        %870 = vmatprep.mubr.bf16.mxu0 0
        %871 = vmatmul.mubr.bf16.gmra.mrb[0].mxu0 %v804
        %v872 = vpop.f32.mrb[0].mxu0
        %v873 = vadd.f32 0.0, %v872
        %v874 = vpop.f32.mrb[0].mxu0
        %v875 = vpop.f32.mrb[0].mxu0
        %v876 = vpop.f32.mrb[0].mxu0
        %877 = vmatprep.mubr.bf16.mxu0 0
        %878 = vmatmul.mubr.bf16.gmra.mrb[0].mxu0 %v807
        %v879 = vpop.f32.mrb[0].mxu0
        %v880 = vadd.f32 0.0, %v879
        %v881 = vpop.f32.mrb[0].mxu0
        %v882 = vpop.f32.mrb[0].mxu0
        %v883 = vpop.f32.mrb[0].mxu0
        %884 = vmatprep.mubr.bf16.mxu0 0
        %885 = vmatmul.mubr.bf16.gmra.mrb[0].mxu0 %v810
        %v886 = vpop.f32.mrb[0].mxu0
        %v887 = vadd.f32 0.0, %v886
        %v888 = vpop.f32.mrb[0].mxu0
        %v889 = vpop.f32.mrb[0].mxu0
        %v890 = vpop.f32.mrb[0].mxu0
        %891 = vmatprep.mubr.bf16.mxu0 0
        %892 = vmatmul.mubr.bf16.gmra.mrb[0].mxu0 %v813
        %v893 = vpop.f32.mrb[0].mxu0
        %v894 = vadd.f32 0.0, %v893
        %v895 = vpop.f32.mrb[0].mxu0
        %v896 = vpop.f32.mrb[0].mxu0
        %v897 = vpop.f32.mrb[0].mxu0
        %898 = vmatprep.mubr.bf16.mxu0 0
        %899 = vmatmul.mubr.bf16.gmra.mrb[0].mxu0 %v816
        %v900 = vpop.f32.mrb[0].mxu0
        %v901 = vadd.f32 0.0, %v900
        %v902 = vpop.f32.mrb[0].mxu0
        %v903 = vpop.f32.mrb[0].mxu0
        %v904 = vpop.f32.mrb[0].mxu0
        %905 = vmatprep.mubr.bf16.mxu0 0
        %906 = vmatmul.mubr.bf16.gmra.mrb[0].mxu0 %v819
        %v907 = vpop.f32.mrb[0].mxu0
        %v908 = vadd.f32 0.0, %v907
        %v909 = vpop.f32.mrb[0].mxu0
        %v910 = vpop.f32.mrb[0].mxu0
        %v911 = vpop.f32.mrb[0].mxu0
        %912 = vdwg.mxu0
        %v913 = vadd.f32 %v743, %v859
        %v914 = vadd.f32 %v750, %v866
        %v915 = vadd.f32 %v757, %v873
        %v916 = vadd.f32 %v764, %v880
        %v917 = vadd.f32 %v771, %v887
        %v918 = vadd.f32 %v778, %v894
        %v919 = vadd.f32 %v785, %v901
        %v920 = vadd.f32 %v792, %v908
        %v921 = vshrl.u32 %v406, 16
        %v923 = vshll.u32 %v406, 16
        %v925 = vrot.slane %v923, 1
        %v926 = vor.u32 %v921, %v925
        %v927 = vshll.u32 %v407, 16
        %v929 = vrot.slane %v927, 1
        %v930 = vsel %vm502, %v926, %v929
        %v931 = vshrl.u32 %v407, 16
        %v933 = vor.u32 %v931, %v929
        %v934 = vshll.u32 %v408, 16
        %v936 = vrot.slane %v934, 1
        %v937 = vsel %vm502, %v933, %v936
        %v938 = vshrl.u32 %v408, 16
        %v940 = vor.u32 %v938, %v936
        %v941 = vshll.u32 %v409, 16
        %v943 = vrot.slane %v941, 1
        %v944 = vsel %vm502, %v940, %v943
        %v945 = vshrl.u32 %v409, 16
        %v947 = vor.u32 %v945, %v943
        %v948 = vshll.u32 %v410, 16
        %v950 = vrot.slane %v948, 1
        %v951 = vsel %vm502, %v947, %v950
        %v952 = vshrl.u32 %v410, 16
        %v954 = vor.u32 %v952, %v950
        %v955 = vshll.u32 %v411, 16
        %v957 = vrot.slane %v955, 1
        %v958 = vsel %vm502, %v954, %v957
        %v959 = vshrl.u32 %v411, 16
        %v961 = vor.u32 %v959, %v957
        %v962 = vshll.u32 %v412, 16
        %v964 = vrot.slane %v962, 1
        %v965 = vsel %vm502, %v961, %v964
        %v966 = vshrl.u32 %v412, 16
        %v968 = vor.u32 %v966, %v964
        %v969 = vshll.u32 %v413, 16
        %v971 = vrot.slane %v969, 1
        %v972 = vsel %vm502, %v968, %v971
        %v973 = vshrl.u32 %v413, 16
        %v975 = vor.u32 %v973, %v971
        %v976 = vsel %vm502, %v975, %v508
        %v978 = vsel %vm571, %v930, 0
        %v981 = vsel %vm571, %v937, 0
        %v984 = vsel %vm571, %v944, 0
        %v987 = vsel %vm571, %v951, 0
        %v990 = vsel %vm571, %v958, 0
        %v993 = vsel %vm571, %v965, 0
        %v996 = vsel %vm571, %v972, 0
        %v999 = vsel %vm571, %v976, 0
        %v1002 = vsel %vm596, %v232, 0
        %1004 = vmatprep.subr.bf16.mxu0 0
        %1005 = vmatpush1.bf16.msra.mxu0 %v1002
        %1006 = vmatprep.subr.bf16.mxu0 0
        %1007 = vmatpush1.bf16.msra.mxu0 0
        %1008 = vmatprep.subr.bf16.mxu0 0
        %1009 = vmatpush1.bf16.msra.mxu0 0
        %1010 = vmatprep.subr.bf16.mxu0 0
        %1011 = vmatpush1.bf16.msra.mxu0 0
        %1012 = vmatprep.subr.bf16.mxu0 0
        %1013 = vmatpush1.bf16.msra.mxu0 0
        %1014 = vmatprep.subr.bf16.mxu0 0
        %1015 = vmatpush1.bf16.msra.mxu0 0
        %1016 = vmatprep.subr.bf16.mxu0 0
        %1017 = vmatpush1.bf16.msra.mxu0 0
        %1018 = vmatprep.subr.bf16.mxu0 0
        %1019 = vmatpush1.bf16.msra.mxu0 0
        %1020 = vmatprep.subr.bf16.mxu0 0
        %1021 = vmatpush1.bf16.msra.mxu0 0
        %1022 = vmatprep.subr.bf16.mxu0 0
        %1023 = vmatpush1.bf16.msra.mxu0 0
        %1024 = vmatprep.subr.bf16.mxu0 0
        %1025 = vmatpush1.bf16.msra.mxu0 0
        %1026 = vmatprep.subr.bf16.mxu0 0
        %1027 = vmatpush1.bf16.msra.mxu0 0
        %1028 = vmatprep.subr.bf16.mxu0 0
        %1029 = vmatpush1.bf16.msra.mxu0 0
        %1030 = vmatprep.subr.bf16.mxu0 0
        %1031 = vmatpush1.bf16.msra.mxu0 0
        %1032 = vmatprep.subr.bf16.mxu0 0
        %1033 = vmatpush1.bf16.msra.mxu0 0
        %1034 = vmatprep.subr.bf16.mxu0 0
        %1035 = vmatpush1.bf16.msra.mxu0 0
        %1036 = vmatprep.mubr.bf16.mxu0 0
        %1037 = vmatmul.mubr.bf16.gmra.mrb[0].mxu0 %v978
        %v1038 = vpop.f32.mrb[0].mxu0
        %v1039 = vadd.f32 0.0, %v1038
        %v1040 = vpop.f32.mrb[0].mxu0
        %v1041 = vpop.f32.mrb[0].mxu0
        %v1042 = vpop.f32.mrb[0].mxu0
        %1043 = vmatprep.mubr.bf16.mxu0 0
        %1044 = vmatmul.mubr.bf16.gmra.mrb[0].mxu0 %v981
        %v1045 = vpop.f32.mrb[0].mxu0
        %v1046 = vadd.f32 0.0, %v1045
        %v1047 = vpop.f32.mrb[0].mxu0
        %v1048 = vpop.f32.mrb[0].mxu0
        %v1049 = vpop.f32.mrb[0].mxu0
        %1050 = vmatprep.mubr.bf16.mxu0 0
        %1051 = vmatmul.mubr.bf16.gmra.mrb[0].mxu0 %v984
        %v1052 = vpop.f32.mrb[0].mxu0
        %v1053 = vadd.f32 0.0, %v1052
        %v1054 = vpop.f32.mrb[0].mxu0
        %v1055 = vpop.f32.mrb[0].mxu0
        %v1056 = vpop.f32.mrb[0].mxu0
        %1057 = vmatprep.mubr.bf16.mxu0 0
        %1058 = vmatmul.mubr.bf16.gmra.mrb[0].mxu0 %v987
        %v1059 = vpop.f32.mrb[0].mxu0
        %v1060 = vadd.f32 0.0, %v1059
        %v1061 = vpop.f32.mrb[0].mxu0
        %v1062 = vpop.f32.mrb[0].mxu0
        %v1063 = vpop.f32.mrb[0].mxu0
        %1064 = vmatprep.mubr.bf16.mxu0 0
        %1065 = vmatmul.mubr.bf16.gmra.mrb[0].mxu0 %v990
        %v1066 = vpop.f32.mrb[0].mxu0
        %v1067 = vadd.f32 0.0, %v1066
        %v1068 = vpop.f32.mrb[0].mxu0
        %v1069 = vpop.f32.mrb[0].mxu0
        %v1070 = vpop.f32.mrb[0].mxu0
        %1071 = vmatprep.mubr.bf16.mxu0 0
        %1072 = vmatmul.mubr.bf16.gmra.mrb[0].mxu0 %v993
        %v1073 = vpop.f32.mrb[0].mxu0
        %v1074 = vadd.f32 0.0, %v1073
        %v1075 = vpop.f32.mrb[0].mxu0
        %v1076 = vpop.f32.mrb[0].mxu0
        %v1077 = vpop.f32.mrb[0].mxu0
        %1078 = vmatprep.mubr.bf16.mxu0 0
        %1079 = vmatmul.mubr.bf16.gmra.mrb[0].mxu0 %v996
        %v1080 = vpop.f32.mrb[0].mxu0
        %v1081 = vadd.f32 0.0, %v1080
        %v1082 = vpop.f32.mrb[0].mxu0
        %v1083 = vpop.f32.mrb[0].mxu0
        %v1084 = vpop.f32.mrb[0].mxu0
        %1085 = vmatprep.mubr.bf16.mxu0 0
        %1086 = vmatmul.mubr.bf16.gmra.mrb[0].mxu0 %v999
        %v1087 = vpop.f32.mrb[0].mxu0
        %v1088 = vadd.f32 0.0, %v1087
        %v1089 = vpop.f32.mrb[0].mxu0
        %v1090 = vpop.f32.mrb[0].mxu0
        %v1091 = vpop.f32.mrb[0].mxu0
        %1092 = vdwg.mxu0
        %v1093 = vadd.f32 %v913, %v1039
        %v1094 = vadd.f32 %v914, %v1046
        %v1095 = vadd.f32 %v915, %v1053
        %v1096 = vadd.f32 %v916, %v1060
        %v1097 = vadd.f32 %v917, %v1067
        %v1098 = vadd.f32 %v918, %v1074
        %v1099 = vadd.f32 %v919, %v1081
        %v1100 = vadd.f32 %v920, %v1088
        %v1101 = vsel %vm571, %v501, 0
        %v1104 = vsel %vm596, %v234, 0
        %1106 = vmatprep.subr.bf16.mxu0 0
        %1107 = vmatpush1.bf16.msra.mxu0 %v1104
        %1108 = vmatprep.subr.bf16.mxu0 0
        %1109 = vmatpush1.bf16.msra.mxu0 0
        %1110 = vmatprep.subr.bf16.mxu0 0
        %1111 = vmatpush1.bf16.msra.mxu0 0
        %1112 = vmatprep.subr.bf16.mxu0 0
        %1113 = vmatpush1.bf16.msra.mxu0 0
        %1114 = vmatprep.subr.bf16.mxu0 0
        %1115 = vmatpush1.bf16.msra.mxu0 0
        %1116 = vmatprep.subr.bf16.mxu0 0
        %1117 = vmatpush1.bf16.msra.mxu0 0
        %1118 = vmatprep.subr.bf16.mxu0 0
        %1119 = vmatpush1.bf16.msra.mxu0 0
        %1120 = vmatprep.subr.bf16.mxu0 0
        %1121 = vmatpush1.bf16.msra.mxu0 0
        %1122 = vmatprep.subr.bf16.mxu0 0
        %1123 = vmatpush1.bf16.msra.mxu0 0
        %1124 = vmatprep.subr.bf16.mxu0 0
        %1125 = vmatpush1.bf16.msra.mxu0 0
        %1126 = vmatprep.subr.bf16.mxu0 0
        %1127 = vmatpush1.bf16.msra.mxu0 0
        %1128 = vmatprep.subr.bf16.mxu0 0
        %1129 = vmatpush1.bf16.msra.mxu0 0
        %1130 = vmatprep.subr.bf16.mxu0 0
        %1131 = vmatpush1.bf16.msra.mxu0 0
        %1132 = vmatprep.subr.bf16.mxu0 0
        %1133 = vmatpush1.bf16.msra.mxu0 0
        %1134 = vmatprep.subr.bf16.mxu0 0
        %1135 = vmatpush1.bf16.msra.mxu0 0
        %1136 = vmatprep.subr.bf16.mxu0 0
        %1137 = vmatpush1.bf16.msra.mxu0 0
        %1138 = vmatprep.mubr.bf16.mxu0 0
        %1139 = vmatmul.mubr.bf16.gmra.mrb[0].mxu0 %v691
        %v1140 = vpop.f32.mrb[0].mxu0
        %v1141 = vadd.f32 0.0, %v1140
        %v1142 = vpop.f32.mrb[0].mxu0
        %v1143 = vpop.f32.mrb[0].mxu0
        %v1144 = vpop.f32.mrb[0].mxu0
        %1145 = vmatprep.mubr.bf16.mxu0 0
        %1146 = vmatmul.mubr.bf16.gmra.mrb[0].mxu0 %v693
        %v1147 = vpop.f32.mrb[0].mxu0
        %v1148 = vadd.f32 0.0, %v1147
        %v1149 = vpop.f32.mrb[0].mxu0
        %v1150 = vpop.f32.mrb[0].mxu0
        %v1151 = vpop.f32.mrb[0].mxu0
        %1152 = vmatprep.mubr.bf16.mxu0 0
        %1153 = vmatmul.mubr.bf16.gmra.mrb[0].mxu0 %v695
        %v1154 = vpop.f32.mrb[0].mxu0
        %v1155 = vadd.f32 0.0, %v1154
        %v1156 = vpop.f32.mrb[0].mxu0
        %v1157 = vpop.f32.mrb[0].mxu0
        %v1158 = vpop.f32.mrb[0].mxu0
        %1159 = vmatprep.mubr.bf16.mxu0 0
        %1160 = vmatmul.mubr.bf16.gmra.mrb[0].mxu0 %v697
        %v1161 = vpop.f32.mrb[0].mxu0
        %v1162 = vadd.f32 0.0, %v1161
        %v1163 = vpop.f32.mrb[0].mxu0
        %v1164 = vpop.f32.mrb[0].mxu0
        %v1165 = vpop.f32.mrb[0].mxu0
        %1166 = vmatprep.mubr.bf16.mxu0 0
        %1167 = vmatmul.mubr.bf16.gmra.mrb[0].mxu0 %v699
        %v1168 = vpop.f32.mrb[0].mxu0
        %v1169 = vadd.f32 0.0, %v1168
        %v1170 = vpop.f32.mrb[0].mxu0
        %v1171 = vpop.f32.mrb[0].mxu0
        %v1172 = vpop.f32.mrb[0].mxu0
        %1173 = vmatprep.mubr.bf16.mxu0 0
        %1174 = vmatmul.mubr.bf16.gmra.mrb[0].mxu0 %v701
        %v1175 = vpop.f32.mrb[0].mxu0
        %v1176 = vadd.f32 0.0, %v1175
        %v1177 = vpop.f32.mrb[0].mxu0
        %v1178 = vpop.f32.mrb[0].mxu0
        %v1179 = vpop.f32.mrb[0].mxu0
        %1180 = vmatprep.mubr.bf16.mxu0 0
        %1181 = vmatmul.mubr.bf16.gmra.mrb[0].mxu0 %v703
        %v1182 = vpop.f32.mrb[0].mxu0
        %v1183 = vadd.f32 0.0, %v1182
        %v1184 = vpop.f32.mrb[0].mxu0
        %v1185 = vpop.f32.mrb[0].mxu0
        %v1186 = vpop.f32.mrb[0].mxu0
        %1187 = vmatprep.mubr.bf16.mxu0 0
        %1188 = vmatmul.mubr.bf16.gmra.mrb[0].mxu0 %v1101
        %v1189 = vpop.f32.mrb[0].mxu0
        %v1190 = vadd.f32 0.0, %v1189
        %v1191 = vpop.f32.mrb[0].mxu0
        %v1192 = vpop.f32.mrb[0].mxu0
        %v1193 = vpop.f32.mrb[0].mxu0
        %1194 = vdwg.mxu0
        %v1195 = vadd.f32 %v1093, %v1141
        %v1196 = vadd.f32 %v1094, %v1148
        %v1197 = vadd.f32 %v1095, %v1155
        %v1198 = vadd.f32 %v1096, %v1162
        %v1199 = vadd.f32 %v1097, %v1169
        %v1200 = vadd.f32 %v1098, %v1176
        %v1201 = vadd.f32 %v1099, %v1183
        %v1202 = vadd.f32 %v1100, %v1190
        %v1203 = vshrl.u32 %v501, 16
        %v1205 = vor.u32 %v1203, %v569
        %v1206 = vsel %vm502, %v1205, %v508
        %v1208 = vsel %vm571, %v1206, 0
        %v1211 = vsel %vm596, %v236, 0
        %1213 = vmatprep.subr.bf16.mxu0 0
        %1214 = vmatpush1.bf16.msra.mxu0 %v1211
        %1215 = vmatprep.subr.bf16.mxu0 0
        %1216 = vmatpush1.bf16.msra.mxu0 0
        %1217 = vmatprep.subr.bf16.mxu0 0
        %1218 = vmatpush1.bf16.msra.mxu0 0
        %1219 = vmatprep.subr.bf16.mxu0 0
        %1220 = vmatpush1.bf16.msra.mxu0 0
        %1221 = vmatprep.subr.bf16.mxu0 0
        %1222 = vmatpush1.bf16.msra.mxu0 0
        %1223 = vmatprep.subr.bf16.mxu0 0
        %1224 = vmatpush1.bf16.msra.mxu0 0
        %1225 = vmatprep.subr.bf16.mxu0 0
        %1226 = vmatpush1.bf16.msra.mxu0 0
        %1227 = vmatprep.subr.bf16.mxu0 0
        %1228 = vmatpush1.bf16.msra.mxu0 0
        %1229 = vmatprep.subr.bf16.mxu0 0
        %1230 = vmatpush1.bf16.msra.mxu0 0
        %1231 = vmatprep.subr.bf16.mxu0 0
        %1232 = vmatpush1.bf16.msra.mxu0 0
        %1233 = vmatprep.subr.bf16.mxu0 0
        %1234 = vmatpush1.bf16.msra.mxu0 0
        %1235 = vmatprep.subr.bf16.mxu0 0
        %1236 = vmatpush1.bf16.msra.mxu0 0
        %1237 = vmatprep.subr.bf16.mxu0 0
        %1238 = vmatpush1.bf16.msra.mxu0 0
        %1239 = vmatprep.subr.bf16.mxu0 0
        %1240 = vmatpush1.bf16.msra.mxu0 0
        %1241 = vmatprep.subr.bf16.mxu0 0
        %1242 = vmatpush1.bf16.msra.mxu0 0
        %1243 = vmatprep.subr.bf16.mxu0 0
        %1244 = vmatpush1.bf16.msra.mxu0 0
        %1245 = vmatprep.mubr.bf16.mxu0 0
        %1246 = vmatmul.mubr.bf16.gmra.mrb[0].mxu0 %v576
        %v1247 = vpop.f32.mrb[0].mxu0
        %v1248 = vadd.f32 0.0, %v1247
        %v1249 = vpop.f32.mrb[0].mxu0
        %v1250 = vpop.f32.mrb[0].mxu0
        %v1251 = vpop.f32.mrb[0].mxu0
        %1252 = vmatprep.mubr.bf16.mxu0 0
        %1253 = vmatmul.mubr.bf16.gmra.mrb[0].mxu0 %v579
        %v1254 = vpop.f32.mrb[0].mxu0
        %v1255 = vadd.f32 0.0, %v1254
        %v1256 = vpop.f32.mrb[0].mxu0
        %v1257 = vpop.f32.mrb[0].mxu0
        %v1258 = vpop.f32.mrb[0].mxu0
        %1259 = vmatprep.mubr.bf16.mxu0 0
        %1260 = vmatmul.mubr.bf16.gmra.mrb[0].mxu0 %v582
        %v1261 = vpop.f32.mrb[0].mxu0
        %v1262 = vadd.f32 0.0, %v1261
        %v1263 = vpop.f32.mrb[0].mxu0
        %v1264 = vpop.f32.mrb[0].mxu0
        %v1265 = vpop.f32.mrb[0].mxu0
        %1266 = vmatprep.mubr.bf16.mxu0 0
        %1267 = vmatmul.mubr.bf16.gmra.mrb[0].mxu0 %v585
        %v1268 = vpop.f32.mrb[0].mxu0
        %v1269 = vadd.f32 0.0, %v1268
        %v1270 = vpop.f32.mrb[0].mxu0
        %v1271 = vpop.f32.mrb[0].mxu0
        %v1272 = vpop.f32.mrb[0].mxu0
        %1273 = vmatprep.mubr.bf16.mxu0 0
        %1274 = vmatmul.mubr.bf16.gmra.mrb[0].mxu0 %v588
        %v1275 = vpop.f32.mrb[0].mxu0
        %v1276 = vadd.f32 0.0, %v1275
        %v1277 = vpop.f32.mrb[0].mxu0
        %v1278 = vpop.f32.mrb[0].mxu0
        %v1279 = vpop.f32.mrb[0].mxu0
        %1280 = vmatprep.mubr.bf16.mxu0 0
        %1281 = vmatmul.mubr.bf16.gmra.mrb[0].mxu0 %v591
        %v1282 = vpop.f32.mrb[0].mxu0
        %v1283 = vadd.f32 0.0, %v1282
        %v1284 = vpop.f32.mrb[0].mxu0
        %v1285 = vpop.f32.mrb[0].mxu0
        %v1286 = vpop.f32.mrb[0].mxu0
        %1287 = vmatprep.mubr.bf16.mxu0 0
        %1288 = vmatmul.mubr.bf16.gmra.mrb[0].mxu0 %v594
        %v1289 = vpop.f32.mrb[0].mxu0
        %v1290 = vadd.f32 0.0, %v1289
        %v1291 = vpop.f32.mrb[0].mxu0
        %v1292 = vpop.f32.mrb[0].mxu0
        %v1293 = vpop.f32.mrb[0].mxu0
        %1294 = vmatprep.mubr.bf16.mxu0 0
        %1295 = vmatmul.mubr.bf16.gmra.mrb[0].mxu0 %v1208
        %v1296 = vpop.f32.mrb[0].mxu0
        %v1297 = vadd.f32 0.0, %v1296
        %v1298 = vpop.f32.mrb[0].mxu0
        %v1299 = vpop.f32.mrb[0].mxu0
        %v1300 = vpop.f32.mrb[0].mxu0
        %1301 = vdwg.mxu0
        %v1302 = vadd.f32 %v1195, %v1248
        %v1303 = vadd.f32 %v1196, %v1255
        %v1304 = vadd.f32 %v1197, %v1262
        %v1305 = vadd.f32 %v1198, %v1269
        %v1306 = vadd.f32 %v1199, %v1276
        %v1307 = vadd.f32 %v1200, %v1283
        %v1308 = vadd.f32 %v1201, %v1290
        %v1309 = vadd.f32 %v1202, %v1297
        %v1311 = vlaneseq
        %v1312 = vshrl.u32 %v1311, 7
        %v1313 = vsub.s32 0, %v1312
        %v1314 = vrot.slane %v224, %v1313
        %v1316 = vadd.f32 %v1302, %v1314
        %v1317 = vadd.f32 %v1303, %v1314
        %v1318 = vadd.f32 %v1304, %v1314
        %v1319 = vadd.f32 %v1305, %v1314
        %v1320 = vadd.f32 %v1306, %v1314
        %v1321 = vadd.f32 %v1307, %v1314
        %v1322 = vadd.f32 %v1308, %v1314
        %v1323 = vadd.f32 %v1309, %v1314
        %v1324 = vmax.f32 %v1316, 0.0
        %v1325 = vmax.f32 %v1317, 0.0
        %v1326 = vmax.f32 %v1318, 0.0
        %v1327 = vmax.f32 %v1319, 0.0
        %v1328 = vmax.f32 %v1320, 0.0
        %v1329 = vmax.f32 %v1321, 0.0
        %v1330 = vmax.f32 %v1322, 0.0
        %v1331 = vmax.f32 %v1323, 0.0
        %v1332 = vpack.c.bf16 %v1324, %v1324
        %v1333 = vpack.c.bf16 %v1325, %v1325
        %v1334 = vpack.c.bf16 %v1326, %v1326
        %v1335 = vpack.c.bf16 %v1327, %v1327
        %v1336 = vpack.c.bf16 %v1328, %v1328
        %v1337 = vpack.c.bf16 %v1329, %v1329
        %v1338 = vpack.c.bf16 %v1330, %v1330
        %v1339 = vpack.c.bf16 %v1331, %v1331
        %v1341 = vshrl.u32 %v1332, 16
        %v1343 = vrot.slane %v1341, 7
        %v1344 = vshll.u32 %v1332, 16
        %v1346 = vor.u32 %v1343, %v1344
        %v1348 = vshrl.u32 %v1333, 16
        %v1350 = vrot.slane %v1348, 7
        %v1351 = vshll.u32 %v1333, 16
        %v1353 = vor.u32 %v1350, %v1351
        %v1355 = vshrl.u32 %v1334, 16
        %v1357 = vrot.slane %v1355, 7
        %v1358 = vshll.u32 %v1334, 16
        %v1360 = vor.u32 %v1357, %v1358
        %v1362 = vshrl.u32 %v1335, 16
        %v1364 = vrot.slane %v1362, 7
        %v1365 = vshll.u32 %v1335, 16
        %v1367 = vor.u32 %v1364, %v1365
        %v1369 = vshrl.u32 %v1336, 16
        %v1371 = vrot.slane %v1369, 7
        %v1372 = vshll.u32 %v1336, 16
        %v1374 = vor.u32 %v1371, %v1372
        %v1376 = vshrl.u32 %v1337, 16
        %v1378 = vrot.slane %v1376, 7
        %v1379 = vshll.u32 %v1337, 16
        %v1381 = vor.u32 %v1378, %v1379
        %v1383 = vshrl.u32 %v1338, 16
        %v1385 = vrot.slane %v1383, 7
        %v1386 = vshll.u32 %v1338, 16
        %v1388 = vor.u32 %v1385, %v1386
        %v1390 = vshrl.u32 %v1339, 16
        %v1392 = vrot.slane %v1390, 7
        %v1393 = vshll.u32 %v1339, 16
        %v1395 = vor.u32 %v1392, %v1393
        %v1404 = vsel %vm394, 0, %v1346
        %v1405 = vsel %vm394, 0, %v1353
        %v1406 = vsel %vm394, 0, %v1360
        %v1407 = vsel %vm394, 0, %v1367
        %v1408 = vsel %vm394, 0, %v1374
        %v1409 = vsel %vm394, 0, %v1381
        %v1410 = vsel %vm394, 0, %v1388
        %v1411 = vsel %vm394, 0, %v1395
        %v1412 = vsel %vm405, %v1404, 0
        %v1413 = vsel %vm405, %v1405, 0
        %v1414 = vsel %vm405, %v1406, 0
        %v1415 = vsel %vm405, %v1407, 0
        %v1416 = vsel %vm405, %v1408, 0
        %v1417 = vsel %vm405, %v1409, 0
        %v1418 = vsel %vm405, %v1410, 0
        %v1419 = vsel %vm405, %v1411, 0
        %v1421 = vshll.u32 %v1412, 16
        %v1423 = vrot.slane %v1421, 1
        %v1424 = vsel %vm502, %v509, %v1423
        %v1425 = vshrl.u32 %v1412, 16
        %v1427 = vor.u32 %v1425, %v1423
        %v1429 = vshll.u32 %v1413, 16
        %v1431 = vrot.slane %v1429, 1
        %v1432 = vsel %vm502, %v1427, %v1431
        %v1433 = vshrl.u32 %v1413, 16
        %v1435 = vor.u32 %v1433, %v1431
        %v1437 = vshll.u32 %v1414, 16
        %v1439 = vrot.slane %v1437, 1
        %v1440 = vsel %vm502, %v1435, %v1439
        %v1441 = vshrl.u32 %v1414, 16
        %v1443 = vor.u32 %v1441, %v1439
        %v1445 = vshll.u32 %v1415, 16
        %v1447 = vrot.slane %v1445, 1
        %v1448 = vsel %vm502, %v1443, %v1447
        %v1449 = vshrl.u32 %v1415, 16
        %v1451 = vor.u32 %v1449, %v1447
        %v1453 = vshll.u32 %v1416, 16
        %v1455 = vrot.slane %v1453, 1
        %v1456 = vsel %vm502, %v1451, %v1455
        %v1457 = vshrl.u32 %v1416, 16
        %v1459 = vor.u32 %v1457, %v1455
        %v1461 = vshll.u32 %v1417, 16
        %v1463 = vrot.slane %v1461, 1
        %v1464 = vsel %vm502, %v1459, %v1463
        %v1465 = vshrl.u32 %v1417, 16
        %v1467 = vor.u32 %v1465, %v1463
        %v1469 = vshll.u32 %v1418, 16
        %v1471 = vrot.slane %v1469, 1
        %v1472 = vsel %vm502, %v1467, %v1471
        %v1473 = vshrl.u32 %v1418, 16
        %v1475 = vor.u32 %v1473, %v1471
        %v1477 = vshll.u32 %v1419, 16
        %v1479 = vrot.slane %v1477, 1
        %v1480 = vsel %vm502, %v1475, %v1479
        %v1482 = vsel %vm571, %v1424, 0
        %v1485 = vsel %vm571, %v1432, 0
        %v1488 = vsel %vm571, %v1440, 0
        %v1491 = vsel %vm571, %v1448, 0
        %v1494 = vsel %vm571, %v1456, 0
        %v1497 = vsel %vm571, %v1464, 0
        %v1500 = vsel %vm571, %v1472, 0
        %v1503 = vsel %vm571, %v1480, 0
        %v1506 = vsel %vm596, %v239, 0
        %1508 = vmatprep.subr.bf16.mxu0 0
        %1509 = vmatpush1.bf16.msra.mxu0 %v1506
        %1510 = vmatprep.subr.bf16.mxu0 0
        %1511 = vmatpush1.bf16.msra.mxu0 0
        %1512 = vmatprep.subr.bf16.mxu0 0
        %1513 = vmatpush1.bf16.msra.mxu0 0
        %1514 = vmatprep.subr.bf16.mxu0 0
        %1515 = vmatpush1.bf16.msra.mxu0 0
        %1516 = vmatprep.subr.bf16.mxu0 0
        %1517 = vmatpush1.bf16.msra.mxu0 0
        %1518 = vmatprep.subr.bf16.mxu0 0
        %1519 = vmatpush1.bf16.msra.mxu0 0
        %1520 = vmatprep.subr.bf16.mxu0 0
        %1521 = vmatpush1.bf16.msra.mxu0 0
        %1522 = vmatprep.subr.bf16.mxu0 0
        %1523 = vmatpush1.bf16.msra.mxu0 0
        %1524 = vmatprep.subr.bf16.mxu0 0
        %1525 = vmatpush1.bf16.msra.mxu0 0
        %1526 = vmatprep.subr.bf16.mxu0 0
        %1527 = vmatpush1.bf16.msra.mxu0 0
        %1528 = vmatprep.subr.bf16.mxu0 0
        %1529 = vmatpush1.bf16.msra.mxu0 0
        %1530 = vmatprep.subr.bf16.mxu0 0
        %1531 = vmatpush1.bf16.msra.mxu0 0
        %1532 = vmatprep.subr.bf16.mxu0 0
        %1533 = vmatpush1.bf16.msra.mxu0 0
        %1534 = vmatprep.subr.bf16.mxu0 0
        %1535 = vmatpush1.bf16.msra.mxu0 0
        %1536 = vmatprep.subr.bf16.mxu0 0
        %1537 = vmatpush1.bf16.msra.mxu0 0
        %1538 = vmatprep.subr.bf16.mxu0 0
        %1539 = vmatpush1.bf16.msra.mxu0 0
        %1540 = vmatprep.mubr.bf16.mxu0 0
        %1541 = vmatmul.mubr.bf16.gmra.mrb[0].mxu0 %v1482
        %v1542 = vpop.f32.mrb[0].mxu0
        %v1543 = vadd.f32 0.0, %v1542
        %v1544 = vpop.f32.mrb[0].mxu0
        %v1545 = vpop.f32.mrb[0].mxu0
        %v1546 = vpop.f32.mrb[0].mxu0
        %1547 = vmatprep.mubr.bf16.mxu0 0
        %1548 = vmatmul.mubr.bf16.gmra.mrb[0].mxu0 %v1485
        %v1549 = vpop.f32.mrb[0].mxu0
        %v1550 = vadd.f32 0.0, %v1549
        %v1551 = vpop.f32.mrb[0].mxu0
        %v1552 = vpop.f32.mrb[0].mxu0
        %v1553 = vpop.f32.mrb[0].mxu0
        %1554 = vmatprep.mubr.bf16.mxu0 0
        %1555 = vmatmul.mubr.bf16.gmra.mrb[0].mxu0 %v1488
        %v1556 = vpop.f32.mrb[0].mxu0
        %v1557 = vadd.f32 0.0, %v1556
        %v1558 = vpop.f32.mrb[0].mxu0
        %v1559 = vpop.f32.mrb[0].mxu0
        %v1560 = vpop.f32.mrb[0].mxu0
        %1561 = vmatprep.mubr.bf16.mxu0 0
        %1562 = vmatmul.mubr.bf16.gmra.mrb[0].mxu0 %v1491
        %v1563 = vpop.f32.mrb[0].mxu0
        %v1564 = vadd.f32 0.0, %v1563
        %v1565 = vpop.f32.mrb[0].mxu0
        %v1566 = vpop.f32.mrb[0].mxu0
        %v1567 = vpop.f32.mrb[0].mxu0
        %1568 = vmatprep.mubr.bf16.mxu0 0
        %1569 = vmatmul.mubr.bf16.gmra.mrb[0].mxu0 %v1494
        %v1570 = vpop.f32.mrb[0].mxu0
        %v1571 = vadd.f32 0.0, %v1570
        %v1572 = vpop.f32.mrb[0].mxu0
        %v1573 = vpop.f32.mrb[0].mxu0
        %v1574 = vpop.f32.mrb[0].mxu0
        %1575 = vmatprep.mubr.bf16.mxu0 0
        %1576 = vmatmul.mubr.bf16.gmra.mrb[0].mxu0 %v1497
        %v1577 = vpop.f32.mrb[0].mxu0
        %v1578 = vadd.f32 0.0, %v1577
        %v1579 = vpop.f32.mrb[0].mxu0
        %v1580 = vpop.f32.mrb[0].mxu0
        %v1581 = vpop.f32.mrb[0].mxu0
        %1582 = vmatprep.mubr.bf16.mxu0 0
        %1583 = vmatmul.mubr.bf16.gmra.mrb[0].mxu0 %v1500
        %v1584 = vpop.f32.mrb[0].mxu0
        %v1585 = vadd.f32 0.0, %v1584
        %v1586 = vpop.f32.mrb[0].mxu0
        %v1587 = vpop.f32.mrb[0].mxu0
        %v1588 = vpop.f32.mrb[0].mxu0
        %1589 = vmatprep.mubr.bf16.mxu0 0
        %1590 = vmatmul.mubr.bf16.gmra.mrb[0].mxu0 %v1503
        %v1591 = vpop.f32.mrb[0].mxu0
        %v1592 = vadd.f32 0.0, %v1591
        %v1593 = vpop.f32.mrb[0].mxu0
        %v1594 = vpop.f32.mrb[0].mxu0
        %v1595 = vpop.f32.mrb[0].mxu0
        %1596 = vdwg.mxu0
        %v1597 = vsel %vm571, %v1412, 0
        %v1599 = vsel %vm571, %v1413, 0
        %v1601 = vsel %vm571, %v1414, 0
        %v1603 = vsel %vm571, %v1415, 0
        %v1605 = vsel %vm571, %v1416, 0
        %v1607 = vsel %vm571, %v1417, 0
        %v1609 = vsel %vm571, %v1418, 0
        %v1612 = vsel %vm596, %v237, 0
        %1614 = vmatprep.subr.bf16.mxu0 0
        %1615 = vmatpush1.bf16.msra.mxu0 %v1612
        %1616 = vmatprep.subr.bf16.mxu0 0
        %1617 = vmatpush1.bf16.msra.mxu0 0
        %1618 = vmatprep.subr.bf16.mxu0 0
        %1619 = vmatpush1.bf16.msra.mxu0 0
        %1620 = vmatprep.subr.bf16.mxu0 0
        %1621 = vmatpush1.bf16.msra.mxu0 0
        %1622 = vmatprep.subr.bf16.mxu0 0
        %1623 = vmatpush1.bf16.msra.mxu0 0
        %1624 = vmatprep.subr.bf16.mxu0 0
        %1625 = vmatpush1.bf16.msra.mxu0 0
        %1626 = vmatprep.subr.bf16.mxu0 0
        %1627 = vmatpush1.bf16.msra.mxu0 0
        %1628 = vmatprep.subr.bf16.mxu0 0
        %1629 = vmatpush1.bf16.msra.mxu0 0
        %1630 = vmatprep.subr.bf16.mxu0 0
        %1631 = vmatpush1.bf16.msra.mxu0 0
        %1632 = vmatprep.subr.bf16.mxu0 0
        %1633 = vmatpush1.bf16.msra.mxu0 0
        %1634 = vmatprep.subr.bf16.mxu0 0
        %1635 = vmatpush1.bf16.msra.mxu0 0
        %1636 = vmatprep.subr.bf16.mxu0 0
        %1637 = vmatpush1.bf16.msra.mxu0 0
        %1638 = vmatprep.subr.bf16.mxu0 0
        %1639 = vmatpush1.bf16.msra.mxu0 0
        %1640 = vmatprep.subr.bf16.mxu0 0
        %1641 = vmatpush1.bf16.msra.mxu0 0
        %1642 = vmatprep.subr.bf16.mxu0 0
        %1643 = vmatpush1.bf16.msra.mxu0 0
        %1644 = vmatprep.subr.bf16.mxu0 0
        %1645 = vmatpush1.bf16.msra.mxu0 0
        %1646 = vmatprep.mubr.bf16.mxu0 0
        %1647 = vmatmul.mubr.bf16.gmra.mrb[0].mxu0 %v689
        %v1648 = vpop.f32.mrb[0].mxu0
        %v1649 = vadd.f32 %v1543, %v1648
        %v1650 = vpop.f32.mrb[0].mxu0
        %v1651 = vpop.f32.mrb[0].mxu0
        %v1652 = vpop.f32.mrb[0].mxu0
        %1653 = vmatprep.mubr.bf16.mxu0 0
        %1654 = vmatmul.mubr.bf16.gmra.mrb[0].mxu0 %v1597
        %v1655 = vpop.f32.mrb[0].mxu0
        %v1656 = vadd.f32 %v1550, %v1655
        %v1657 = vpop.f32.mrb[0].mxu0
        %v1658 = vpop.f32.mrb[0].mxu0
        %v1659 = vpop.f32.mrb[0].mxu0
        %1660 = vmatprep.mubr.bf16.mxu0 0
        %1661 = vmatmul.mubr.bf16.gmra.mrb[0].mxu0 %v1599
        %v1662 = vpop.f32.mrb[0].mxu0
        %v1663 = vadd.f32 %v1557, %v1662
        %v1664 = vpop.f32.mrb[0].mxu0
        %v1665 = vpop.f32.mrb[0].mxu0
        %v1666 = vpop.f32.mrb[0].mxu0
        %1667 = vmatprep.mubr.bf16.mxu0 0
        %1668 = vmatmul.mubr.bf16.gmra.mrb[0].mxu0 %v1601
        %v1669 = vpop.f32.mrb[0].mxu0
        %v1670 = vadd.f32 %v1564, %v1669
        %v1671 = vpop.f32.mrb[0].mxu0
        %v1672 = vpop.f32.mrb[0].mxu0
        %v1673 = vpop.f32.mrb[0].mxu0
        %1674 = vmatprep.mubr.bf16.mxu0 0
        %1675 = vmatmul.mubr.bf16.gmra.mrb[0].mxu0 %v1603
        %v1676 = vpop.f32.mrb[0].mxu0
        %v1677 = vadd.f32 %v1571, %v1676
        %v1678 = vpop.f32.mrb[0].mxu0
        %v1679 = vpop.f32.mrb[0].mxu0
        %v1680 = vpop.f32.mrb[0].mxu0
        %1681 = vmatprep.mubr.bf16.mxu0 0
        %1682 = vmatmul.mubr.bf16.gmra.mrb[0].mxu0 %v1605
        %v1683 = vpop.f32.mrb[0].mxu0
        %v1684 = vadd.f32 %v1578, %v1683
        %v1685 = vpop.f32.mrb[0].mxu0
        %v1686 = vpop.f32.mrb[0].mxu0
        %v1687 = vpop.f32.mrb[0].mxu0
        %1688 = vmatprep.mubr.bf16.mxu0 0
        %1689 = vmatmul.mubr.bf16.gmra.mrb[0].mxu0 %v1607
        %v1690 = vpop.f32.mrb[0].mxu0
        %v1691 = vadd.f32 %v1585, %v1690
        %v1692 = vpop.f32.mrb[0].mxu0
        %v1693 = vpop.f32.mrb[0].mxu0
        %v1694 = vpop.f32.mrb[0].mxu0
        %1695 = vmatprep.mubr.bf16.mxu0 0
        %1696 = vmatmul.mubr.bf16.gmra.mrb[0].mxu0 %v1609
        %v1697 = vpop.f32.mrb[0].mxu0
        %v1698 = vadd.f32 %v1592, %v1697
        %v1699 = vpop.f32.mrb[0].mxu0
        %v1700 = vpop.f32.mrb[0].mxu0
        %v1701 = vpop.f32.mrb[0].mxu0
        %1702 = vdwg.mxu0
        %vm1712 = vcmask 1046528
        %v1713 = vrot.slane 0, 1
        %v1714 = vrot.slane %v1412, 1
        %v1715 = vsel %vm1712, %v1713, %v1714
        %v1716 = vrot.slane %v1413, 1
        %v1717 = vsel %vm1712, %v1714, %v1716
        %v1718 = vrot.slane %v1414, 1
        %v1719 = vsel %vm1712, %v1716, %v1718
        %v1720 = vrot.slane %v1415, 1
        %v1721 = vsel %vm1712, %v1718, %v1720
        %v1722 = vrot.slane %v1416, 1
        %v1723 = vsel %vm1712, %v1720, %v1722
        %v1724 = vrot.slane %v1417, 1
        %v1725 = vsel %vm1712, %v1722, %v1724
        %v1726 = vrot.slane %v1418, 1
        %v1727 = vsel %vm1712, %v1724, %v1726
        %v1728 = vrot.slane %v1419, 1
        %v1729 = vsel %vm1712, %v1726, %v1728
        %v1731 = vsel %vm571, %v1715, 0
        %v1734 = vsel %vm571, %v1717, 0
        %v1737 = vsel %vm571, %v1719, 0
        %v1740 = vsel %vm571, %v1721, 0
        %v1743 = vsel %vm571, %v1723, 0
        %v1746 = vsel %vm571, %v1725, 0
        %v1749 = vsel %vm571, %v1727, 0
        %v1752 = vsel %vm571, %v1729, 0
        %v1755 = vsel %vm596, %v241, 0
        %1757 = vmatprep.subr.bf16.mxu0 0
        %1758 = vmatpush1.bf16.msra.mxu0 %v1755
        %1759 = vmatprep.subr.bf16.mxu0 0
        %1760 = vmatpush1.bf16.msra.mxu0 0
        %1761 = vmatprep.subr.bf16.mxu0 0
        %1762 = vmatpush1.bf16.msra.mxu0 0
        %1763 = vmatprep.subr.bf16.mxu0 0
        %1764 = vmatpush1.bf16.msra.mxu0 0
        %1765 = vmatprep.subr.bf16.mxu0 0
        %1766 = vmatpush1.bf16.msra.mxu0 0
        %1767 = vmatprep.subr.bf16.mxu0 0
        %1768 = vmatpush1.bf16.msra.mxu0 0
        %1769 = vmatprep.subr.bf16.mxu0 0
        %1770 = vmatpush1.bf16.msra.mxu0 0
        %1771 = vmatprep.subr.bf16.mxu0 0
        %1772 = vmatpush1.bf16.msra.mxu0 0
        %1773 = vmatprep.subr.bf16.mxu0 0
        %1774 = vmatpush1.bf16.msra.mxu0 0
        %1775 = vmatprep.subr.bf16.mxu0 0
        %1776 = vmatpush1.bf16.msra.mxu0 0
        %1777 = vmatprep.subr.bf16.mxu0 0
        %1778 = vmatpush1.bf16.msra.mxu0 0
        %1779 = vmatprep.subr.bf16.mxu0 0
        %1780 = vmatpush1.bf16.msra.mxu0 0
        %1781 = vmatprep.subr.bf16.mxu0 0
        %1782 = vmatpush1.bf16.msra.mxu0 0
        %1783 = vmatprep.subr.bf16.mxu0 0
        %1784 = vmatpush1.bf16.msra.mxu0 0
        %1785 = vmatprep.subr.bf16.mxu0 0
        %1786 = vmatpush1.bf16.msra.mxu0 0
        %1787 = vmatprep.subr.bf16.mxu0 0
        %1788 = vmatpush1.bf16.msra.mxu0 0
        %1789 = vmatprep.mubr.bf16.mxu0 0
        %1790 = vmatmul.mubr.bf16.gmra.mrb[0].mxu0 %v1731
        %v1791 = vpop.f32.mrb[0].mxu0
        %v1792 = vadd.f32 0.0, %v1791
        %v1793 = vpop.f32.mrb[0].mxu0
        %v1794 = vpop.f32.mrb[0].mxu0
        %v1795 = vpop.f32.mrb[0].mxu0
        %1796 = vmatprep.mubr.bf16.mxu0 0
        %1797 = vmatmul.mubr.bf16.gmra.mrb[0].mxu0 %v1734
        %v1798 = vpop.f32.mrb[0].mxu0
        %v1799 = vadd.f32 0.0, %v1798
        %v1800 = vpop.f32.mrb[0].mxu0
        %v1801 = vpop.f32.mrb[0].mxu0
        %v1802 = vpop.f32.mrb[0].mxu0
        %1803 = vmatprep.mubr.bf16.mxu0 0
        %1804 = vmatmul.mubr.bf16.gmra.mrb[0].mxu0 %v1737
        %v1805 = vpop.f32.mrb[0].mxu0
        %v1806 = vadd.f32 0.0, %v1805
        %v1807 = vpop.f32.mrb[0].mxu0
        %v1808 = vpop.f32.mrb[0].mxu0
        %v1809 = vpop.f32.mrb[0].mxu0
        %1810 = vmatprep.mubr.bf16.mxu0 0
        %1811 = vmatmul.mubr.bf16.gmra.mrb[0].mxu0 %v1740
        %v1812 = vpop.f32.mrb[0].mxu0
        %v1813 = vadd.f32 0.0, %v1812
        %v1814 = vpop.f32.mrb[0].mxu0
        %v1815 = vpop.f32.mrb[0].mxu0
        %v1816 = vpop.f32.mrb[0].mxu0
        %1817 = vmatprep.mubr.bf16.mxu0 0
        %1818 = vmatmul.mubr.bf16.gmra.mrb[0].mxu0 %v1743
        %v1819 = vpop.f32.mrb[0].mxu0
        %v1820 = vadd.f32 0.0, %v1819
        %v1821 = vpop.f32.mrb[0].mxu0
        %v1822 = vpop.f32.mrb[0].mxu0
        %v1823 = vpop.f32.mrb[0].mxu0
        %1824 = vmatprep.mubr.bf16.mxu0 0
        %1825 = vmatmul.mubr.bf16.gmra.mrb[0].mxu0 %v1746
        %v1826 = vpop.f32.mrb[0].mxu0
        %v1827 = vadd.f32 0.0, %v1826
        %v1828 = vpop.f32.mrb[0].mxu0
        %v1829 = vpop.f32.mrb[0].mxu0
        %v1830 = vpop.f32.mrb[0].mxu0
        %1831 = vmatprep.mubr.bf16.mxu0 0
        %1832 = vmatmul.mubr.bf16.gmra.mrb[0].mxu0 %v1749
        %v1833 = vpop.f32.mrb[0].mxu0
        %v1834 = vadd.f32 0.0, %v1833
        %v1835 = vpop.f32.mrb[0].mxu0
        %v1836 = vpop.f32.mrb[0].mxu0
        %v1837 = vpop.f32.mrb[0].mxu0
        %1838 = vmatprep.mubr.bf16.mxu0 0
        %1839 = vmatmul.mubr.bf16.gmra.mrb[0].mxu0 %v1752
        %v1840 = vpop.f32.mrb[0].mxu0
        %v1841 = vadd.f32 0.0, %v1840
        %v1842 = vpop.f32.mrb[0].mxu0
        %v1843 = vpop.f32.mrb[0].mxu0
        %v1844 = vpop.f32.mrb[0].mxu0
        %1845 = vdwg.mxu0
        %v1846 = vadd.f32 %v1649, %v1792
        %v1847 = vadd.f32 %v1656, %v1799
        %v1848 = vadd.f32 %v1663, %v1806
        %v1849 = vadd.f32 %v1670, %v1813
        %v1850 = vadd.f32 %v1677, %v1820
        %v1851 = vadd.f32 %v1684, %v1827
        %v1852 = vadd.f32 %v1691, %v1834
        %v1853 = vadd.f32 %v1698, %v1841
        %v1854 = vsel %vm571, %v1419, 0
        %v1857 = vsel %vm596, %v243, 0
        %1859 = vmatprep.subr.bf16.mxu0 0
        %1860 = vmatpush1.bf16.msra.mxu0 %v1857
        %1861 = vmatprep.subr.bf16.mxu0 0
        %1862 = vmatpush1.bf16.msra.mxu0 0
        %1863 = vmatprep.subr.bf16.mxu0 0
        %1864 = vmatpush1.bf16.msra.mxu0 0
        %1865 = vmatprep.subr.bf16.mxu0 0
        %1866 = vmatpush1.bf16.msra.mxu0 0
        %1867 = vmatprep.subr.bf16.mxu0 0
        %1868 = vmatpush1.bf16.msra.mxu0 0
        %1869 = vmatprep.subr.bf16.mxu0 0
        %1870 = vmatpush1.bf16.msra.mxu0 0
        %1871 = vmatprep.subr.bf16.mxu0 0
        %1872 = vmatpush1.bf16.msra.mxu0 0
        %1873 = vmatprep.subr.bf16.mxu0 0
        %1874 = vmatpush1.bf16.msra.mxu0 0
        %1875 = vmatprep.subr.bf16.mxu0 0
        %1876 = vmatpush1.bf16.msra.mxu0 0
        %1877 = vmatprep.subr.bf16.mxu0 0
        %1878 = vmatpush1.bf16.msra.mxu0 0
        %1879 = vmatprep.subr.bf16.mxu0 0
        %1880 = vmatpush1.bf16.msra.mxu0 0
        %1881 = vmatprep.subr.bf16.mxu0 0
        %1882 = vmatpush1.bf16.msra.mxu0 0
        %1883 = vmatprep.subr.bf16.mxu0 0
        %1884 = vmatpush1.bf16.msra.mxu0 0
        %1885 = vmatprep.subr.bf16.mxu0 0
        %1886 = vmatpush1.bf16.msra.mxu0 0
        %1887 = vmatprep.subr.bf16.mxu0 0
        %1888 = vmatpush1.bf16.msra.mxu0 0
        %1889 = vmatprep.subr.bf16.mxu0 0
        %1890 = vmatpush1.bf16.msra.mxu0 0
        %1891 = vmatprep.mubr.bf16.mxu0 0
        %1892 = vmatmul.mubr.bf16.gmra.mrb[0].mxu0 %v1597
        %v1893 = vpop.f32.mrb[0].mxu0
        %v1894 = vadd.f32 0.0, %v1893
        %v1895 = vpop.f32.mrb[0].mxu0
        %v1896 = vpop.f32.mrb[0].mxu0
        %v1897 = vpop.f32.mrb[0].mxu0
        %1898 = vmatprep.mubr.bf16.mxu0 0
        %1899 = vmatmul.mubr.bf16.gmra.mrb[0].mxu0 %v1599
        %v1900 = vpop.f32.mrb[0].mxu0
        %v1901 = vadd.f32 0.0, %v1900
        %v1902 = vpop.f32.mrb[0].mxu0
        %v1903 = vpop.f32.mrb[0].mxu0
        %v1904 = vpop.f32.mrb[0].mxu0
        %1905 = vmatprep.mubr.bf16.mxu0 0
        %1906 = vmatmul.mubr.bf16.gmra.mrb[0].mxu0 %v1601
        %v1907 = vpop.f32.mrb[0].mxu0
        %v1908 = vadd.f32 0.0, %v1907
        %v1909 = vpop.f32.mrb[0].mxu0
        %v1910 = vpop.f32.mrb[0].mxu0
        %v1911 = vpop.f32.mrb[0].mxu0
        %1912 = vmatprep.mubr.bf16.mxu0 0
        %1913 = vmatmul.mubr.bf16.gmra.mrb[0].mxu0 %v1603
        %v1914 = vpop.f32.mrb[0].mxu0
        %v1915 = vadd.f32 0.0, %v1914
        %v1916 = vpop.f32.mrb[0].mxu0
        %v1917 = vpop.f32.mrb[0].mxu0
        %v1918 = vpop.f32.mrb[0].mxu0
        %1919 = vmatprep.mubr.bf16.mxu0 0
        %1920 = vmatmul.mubr.bf16.gmra.mrb[0].mxu0 %v1605
        %v1921 = vpop.f32.mrb[0].mxu0
        %v1922 = vadd.f32 0.0, %v1921
        %v1923 = vpop.f32.mrb[0].mxu0
        %v1924 = vpop.f32.mrb[0].mxu0
        %v1925 = vpop.f32.mrb[0].mxu0
        %1926 = vmatprep.mubr.bf16.mxu0 0
        %1927 = vmatmul.mubr.bf16.gmra.mrb[0].mxu0 %v1607
        %v1928 = vpop.f32.mrb[0].mxu0
        %v1929 = vadd.f32 0.0, %v1928
        %v1930 = vpop.f32.mrb[0].mxu0
        %v1931 = vpop.f32.mrb[0].mxu0
        %v1932 = vpop.f32.mrb[0].mxu0
        %1933 = vmatprep.mubr.bf16.mxu0 0
        %1934 = vmatmul.mubr.bf16.gmra.mrb[0].mxu0 %v1609
        %v1935 = vpop.f32.mrb[0].mxu0
        %v1936 = vadd.f32 0.0, %v1935
        %v1937 = vpop.f32.mrb[0].mxu0
        %v1938 = vpop.f32.mrb[0].mxu0
        %v1939 = vpop.f32.mrb[0].mxu0
        %1940 = vmatprep.mubr.bf16.mxu0 0
        %1941 = vmatmul.mubr.bf16.gmra.mrb[0].mxu0 %v1854
        %v1942 = vpop.f32.mrb[0].mxu0
        %v1943 = vadd.f32 0.0, %v1942
        %v1944 = vpop.f32.mrb[0].mxu0
        %v1945 = vpop.f32.mrb[0].mxu0
        %v1946 = vpop.f32.mrb[0].mxu0
        %1947 = vdwg.mxu0
        %v1948 = vadd.f32 %v1846, %v1894
        %v1949 = vadd.f32 %v1847, %v1901
        %v1950 = vadd.f32 %v1848, %v1908
        %v1951 = vadd.f32 %v1849, %v1915
        %v1952 = vadd.f32 %v1850, %v1922
        %v1953 = vadd.f32 %v1851, %v1929
        %v1954 = vadd.f32 %v1852, %v1936
        %v1955 = vadd.f32 %v1853, %v1943
        %v1956 = vshrl.u32 %v1419, 16
        %v1958 = vor.u32 %v1956, %v1479
        %v1959 = vsel %vm502, %v1958, %v508
        %v1961 = vsel %vm571, %v1959, 0
        %v1964 = vsel %vm596, %v245, 0
        %1966 = vmatprep.subr.bf16.mxu0 0
        %1967 = vmatpush1.bf16.msra.mxu0 %v1964
        %1968 = vmatprep.subr.bf16.mxu0 0
        %1969 = vmatpush1.bf16.msra.mxu0 0
        %1970 = vmatprep.subr.bf16.mxu0 0
        %1971 = vmatpush1.bf16.msra.mxu0 0
        %1972 = vmatprep.subr.bf16.mxu0 0
        %1973 = vmatpush1.bf16.msra.mxu0 0
        %1974 = vmatprep.subr.bf16.mxu0 0
        %1975 = vmatpush1.bf16.msra.mxu0 0
        %1976 = vmatprep.subr.bf16.mxu0 0
        %1977 = vmatpush1.bf16.msra.mxu0 0
        %1978 = vmatprep.subr.bf16.mxu0 0
        %1979 = vmatpush1.bf16.msra.mxu0 0
        %1980 = vmatprep.subr.bf16.mxu0 0
        %1981 = vmatpush1.bf16.msra.mxu0 0
        %1982 = vmatprep.subr.bf16.mxu0 0
        %1983 = vmatpush1.bf16.msra.mxu0 0
        %1984 = vmatprep.subr.bf16.mxu0 0
        %1985 = vmatpush1.bf16.msra.mxu0 0
        %1986 = vmatprep.subr.bf16.mxu0 0
        %1987 = vmatpush1.bf16.msra.mxu0 0
        %1988 = vmatprep.subr.bf16.mxu0 0
        %1989 = vmatpush1.bf16.msra.mxu0 0
        %1990 = vmatprep.subr.bf16.mxu0 0
        %1991 = vmatpush1.bf16.msra.mxu0 0
        %1992 = vmatprep.subr.bf16.mxu0 0
        %1993 = vmatpush1.bf16.msra.mxu0 0
        %1994 = vmatprep.subr.bf16.mxu0 0
        %1995 = vmatpush1.bf16.msra.mxu0 0
        %1996 = vmatprep.subr.bf16.mxu0 0
        %1997 = vmatpush1.bf16.msra.mxu0 0
        %1998 = vmatprep.mubr.bf16.mxu0 0
        %1999 = vmatmul.mubr.bf16.gmra.mrb[0].mxu0 %v1485
        %v2000 = vpop.f32.mrb[0].mxu0
        %v2001 = vadd.f32 0.0, %v2000
        %v2002 = vpop.f32.mrb[0].mxu0
        %v2003 = vpop.f32.mrb[0].mxu0
        %v2004 = vpop.f32.mrb[0].mxu0
        %2005 = vmatprep.mubr.bf16.mxu0 0
        %2006 = vmatmul.mubr.bf16.gmra.mrb[0].mxu0 %v1488
        %v2007 = vpop.f32.mrb[0].mxu0
        %v2008 = vadd.f32 0.0, %v2007
        %v2009 = vpop.f32.mrb[0].mxu0
        %v2010 = vpop.f32.mrb[0].mxu0
        %v2011 = vpop.f32.mrb[0].mxu0
        %2012 = vmatprep.mubr.bf16.mxu0 0
        %2013 = vmatmul.mubr.bf16.gmra.mrb[0].mxu0 %v1491
        %v2014 = vpop.f32.mrb[0].mxu0
        %v2015 = vadd.f32 0.0, %v2014
        %v2016 = vpop.f32.mrb[0].mxu0
        %v2017 = vpop.f32.mrb[0].mxu0
        %v2018 = vpop.f32.mrb[0].mxu0
        %2019 = vmatprep.mubr.bf16.mxu0 0
        %2020 = vmatmul.mubr.bf16.gmra.mrb[0].mxu0 %v1494
        %v2021 = vpop.f32.mrb[0].mxu0
        %v2022 = vadd.f32 0.0, %v2021
        %v2023 = vpop.f32.mrb[0].mxu0
        %v2024 = vpop.f32.mrb[0].mxu0
        %v2025 = vpop.f32.mrb[0].mxu0
        %2026 = vmatprep.mubr.bf16.mxu0 0
        %2027 = vmatmul.mubr.bf16.gmra.mrb[0].mxu0 %v1497
        %v2028 = vpop.f32.mrb[0].mxu0
        %v2029 = vadd.f32 0.0, %v2028
        %v2030 = vpop.f32.mrb[0].mxu0
        %v2031 = vpop.f32.mrb[0].mxu0
        %v2032 = vpop.f32.mrb[0].mxu0
        %2033 = vmatprep.mubr.bf16.mxu0 0
        %2034 = vmatmul.mubr.bf16.gmra.mrb[0].mxu0 %v1500
        %v2035 = vpop.f32.mrb[0].mxu0
        %v2036 = vadd.f32 0.0, %v2035
        %v2037 = vpop.f32.mrb[0].mxu0
        %v2038 = vpop.f32.mrb[0].mxu0
        %v2039 = vpop.f32.mrb[0].mxu0
        %2040 = vmatprep.mubr.bf16.mxu0 0
        %2041 = vmatmul.mubr.bf16.gmra.mrb[0].mxu0 %v1503
        %v2042 = vpop.f32.mrb[0].mxu0
        %v2043 = vadd.f32 0.0, %v2042
        %v2044 = vpop.f32.mrb[0].mxu0
        %v2045 = vpop.f32.mrb[0].mxu0
        %v2046 = vpop.f32.mrb[0].mxu0
        %2047 = vmatprep.mubr.bf16.mxu0 0
        %2048 = vmatmul.mubr.bf16.gmra.mrb[0].mxu0 %v1961
        %v2049 = vpop.f32.mrb[0].mxu0
        %v2050 = vadd.f32 0.0, %v2049
        %v2051 = vpop.f32.mrb[0].mxu0
        %v2052 = vpop.f32.mrb[0].mxu0
        %v2053 = vpop.f32.mrb[0].mxu0
        %2054 = vdwg.mxu0
        %v2055 = vadd.f32 %v1948, %v2001
        %v2056 = vadd.f32 %v1949, %v2008
        %v2057 = vadd.f32 %v1950, %v2015
        %v2058 = vadd.f32 %v1951, %v2022
        %v2059 = vadd.f32 %v1952, %v2029
        %v2060 = vadd.f32 %v1953, %v2036
        %v2061 = vadd.f32 %v1954, %v2043
        %v2062 = vadd.f32 %v1955, %v2050
        %v2063 = vsel %vm1712, %v1728, %v1713
        %v2065 = vsel %vm571, %v2063, 0
        %v2068 = vsel %vm596, %v247, 0
        %2070 = vmatprep.subr.bf16.mxu0 0
        %2071 = vmatpush1.bf16.msra.mxu0 %v2068
        %2072 = vmatprep.subr.bf16.mxu0 0
        %2073 = vmatpush1.bf16.msra.mxu0 0
        %2074 = vmatprep.subr.bf16.mxu0 0
        %2075 = vmatpush1.bf16.msra.mxu0 0
        %2076 = vmatprep.subr.bf16.mxu0 0
        %2077 = vmatpush1.bf16.msra.mxu0 0
        %2078 = vmatprep.subr.bf16.mxu0 0
        %2079 = vmatpush1.bf16.msra.mxu0 0
        %2080 = vmatprep.subr.bf16.mxu0 0
        %2081 = vmatpush1.bf16.msra.mxu0 0
        %2082 = vmatprep.subr.bf16.mxu0 0
        %2083 = vmatpush1.bf16.msra.mxu0 0
        %2084 = vmatprep.subr.bf16.mxu0 0
        %2085 = vmatpush1.bf16.msra.mxu0 0
        %2086 = vmatprep.subr.bf16.mxu0 0
        %2087 = vmatpush1.bf16.msra.mxu0 0
        %2088 = vmatprep.subr.bf16.mxu0 0
        %2089 = vmatpush1.bf16.msra.mxu0 0
        %2090 = vmatprep.subr.bf16.mxu0 0
        %2091 = vmatpush1.bf16.msra.mxu0 0
        %2092 = vmatprep.subr.bf16.mxu0 0
        %2093 = vmatpush1.bf16.msra.mxu0 0
        %2094 = vmatprep.subr.bf16.mxu0 0
        %2095 = vmatpush1.bf16.msra.mxu0 0
        %2096 = vmatprep.subr.bf16.mxu0 0
        %2097 = vmatpush1.bf16.msra.mxu0 0
        %2098 = vmatprep.subr.bf16.mxu0 0
        %2099 = vmatpush1.bf16.msra.mxu0 0
        %2100 = vmatprep.subr.bf16.mxu0 0
        %2101 = vmatpush1.bf16.msra.mxu0 0
        %2102 = vmatprep.mubr.bf16.mxu0 0
        %2103 = vmatmul.mubr.bf16.gmra.mrb[0].mxu0 %v1734
        %v2104 = vpop.f32.mrb[0].mxu0
        %v2105 = vadd.f32 0.0, %v2104
        %v2106 = vpop.f32.mrb[0].mxu0
        %v2107 = vpop.f32.mrb[0].mxu0
        %v2108 = vpop.f32.mrb[0].mxu0
        %2109 = vmatprep.mubr.bf16.mxu0 0
        %2110 = vmatmul.mubr.bf16.gmra.mrb[0].mxu0 %v1737
        %v2111 = vpop.f32.mrb[0].mxu0
        %v2112 = vadd.f32 0.0, %v2111
        %v2113 = vpop.f32.mrb[0].mxu0
        %v2114 = vpop.f32.mrb[0].mxu0
        %v2115 = vpop.f32.mrb[0].mxu0
        %2116 = vmatprep.mubr.bf16.mxu0 0
        %2117 = vmatmul.mubr.bf16.gmra.mrb[0].mxu0 %v1740
        %v2118 = vpop.f32.mrb[0].mxu0
        %v2119 = vadd.f32 0.0, %v2118
        %v2120 = vpop.f32.mrb[0].mxu0
        %v2121 = vpop.f32.mrb[0].mxu0
        %v2122 = vpop.f32.mrb[0].mxu0
        %2123 = vmatprep.mubr.bf16.mxu0 0
        %2124 = vmatmul.mubr.bf16.gmra.mrb[0].mxu0 %v1743
        %v2125 = vpop.f32.mrb[0].mxu0
        %v2126 = vadd.f32 0.0, %v2125
        %v2127 = vpop.f32.mrb[0].mxu0
        %v2128 = vpop.f32.mrb[0].mxu0
        %v2129 = vpop.f32.mrb[0].mxu0
        %2130 = vmatprep.mubr.bf16.mxu0 0
        %2131 = vmatmul.mubr.bf16.gmra.mrb[0].mxu0 %v1746
        %v2132 = vpop.f32.mrb[0].mxu0
        %v2133 = vadd.f32 0.0, %v2132
        %v2134 = vpop.f32.mrb[0].mxu0
        %v2135 = vpop.f32.mrb[0].mxu0
        %v2136 = vpop.f32.mrb[0].mxu0
        %2137 = vmatprep.mubr.bf16.mxu0 0
        %2138 = vmatmul.mubr.bf16.gmra.mrb[0].mxu0 %v1749
        %v2139 = vpop.f32.mrb[0].mxu0
        %v2140 = vadd.f32 0.0, %v2139
        %v2141 = vpop.f32.mrb[0].mxu0
        %v2142 = vpop.f32.mrb[0].mxu0
        %v2143 = vpop.f32.mrb[0].mxu0
        %2144 = vmatprep.mubr.bf16.mxu0 0
        %2145 = vmatmul.mubr.bf16.gmra.mrb[0].mxu0 %v1752
        %v2146 = vpop.f32.mrb[0].mxu0
        %v2147 = vadd.f32 0.0, %v2146
        %v2148 = vpop.f32.mrb[0].mxu0
        %v2149 = vpop.f32.mrb[0].mxu0
        %v2150 = vpop.f32.mrb[0].mxu0
        %2151 = vmatprep.mubr.bf16.mxu0 0
        %2152 = vmatmul.mubr.bf16.gmra.mrb[0].mxu0 %v2065
        %v2153 = vpop.f32.mrb[0].mxu0
        %v2154 = vadd.f32 0.0, %v2153
        %v2155 = vpop.f32.mrb[0].mxu0
        %v2156 = vpop.f32.mrb[0].mxu0
        %v2157 = vpop.f32.mrb[0].mxu0
        %2158 = vdwg.mxu0
        %v2159 = vadd.f32 %v2055, %v2105
        %v2160 = vadd.f32 %v2056, %v2112
        %v2161 = vadd.f32 %v2057, %v2119
        %v2162 = vadd.f32 %v2058, %v2126
        %v2163 = vadd.f32 %v2059, %v2133
        %v2164 = vadd.f32 %v2060, %v2140
        %v2165 = vadd.f32 %v2061, %v2147
        %v2166 = vadd.f32 %v2062, %v2154
        %v2168 = vsel %vm596, %v249, 0
        %2170 = vmatprep.subr.bf16.mxu0 0
        %2171 = vmatpush1.bf16.msra.mxu0 %v2168
        %2172 = vmatprep.subr.bf16.mxu0 0
        %2173 = vmatpush1.bf16.msra.mxu0 0
        %2174 = vmatprep.subr.bf16.mxu0 0
        %2175 = vmatpush1.bf16.msra.mxu0 0
        %2176 = vmatprep.subr.bf16.mxu0 0
        %2177 = vmatpush1.bf16.msra.mxu0 0
        %2178 = vmatprep.subr.bf16.mxu0 0
        %2179 = vmatpush1.bf16.msra.mxu0 0
        %2180 = vmatprep.subr.bf16.mxu0 0
        %2181 = vmatpush1.bf16.msra.mxu0 0
        %2182 = vmatprep.subr.bf16.mxu0 0
        %2183 = vmatpush1.bf16.msra.mxu0 0
        %2184 = vmatprep.subr.bf16.mxu0 0
        %2185 = vmatpush1.bf16.msra.mxu0 0
        %2186 = vmatprep.subr.bf16.mxu0 0
        %2187 = vmatpush1.bf16.msra.mxu0 0
        %2188 = vmatprep.subr.bf16.mxu0 0
        %2189 = vmatpush1.bf16.msra.mxu0 0
        %2190 = vmatprep.subr.bf16.mxu0 0
        %2191 = vmatpush1.bf16.msra.mxu0 0
        %2192 = vmatprep.subr.bf16.mxu0 0
        %2193 = vmatpush1.bf16.msra.mxu0 0
        %2194 = vmatprep.subr.bf16.mxu0 0
        %2195 = vmatpush1.bf16.msra.mxu0 0
        %2196 = vmatprep.subr.bf16.mxu0 0
        %2197 = vmatpush1.bf16.msra.mxu0 0
        %2198 = vmatprep.subr.bf16.mxu0 0
        %2199 = vmatpush1.bf16.msra.mxu0 0
        %2200 = vmatprep.subr.bf16.mxu0 0
        %2201 = vmatpush1.bf16.msra.mxu0 0
        %2202 = vmatprep.mubr.bf16.mxu0 0
        %2203 = vmatmul.mubr.bf16.gmra.mrb[0].mxu0 %v1599
        %v2204 = vpop.f32.mrb[0].mxu0
        %v2205 = vadd.f32 0.0, %v2204
        %v2206 = vpop.f32.mrb[0].mxu0
        %v2207 = vpop.f32.mrb[0].mxu0
        %v2208 = vpop.f32.mrb[0].mxu0
        %2209 = vmatprep.mubr.bf16.mxu0 0
        %2210 = vmatmul.mubr.bf16.gmra.mrb[0].mxu0 %v1601
        %v2211 = vpop.f32.mrb[0].mxu0
        %v2212 = vadd.f32 0.0, %v2211
        %v2213 = vpop.f32.mrb[0].mxu0
        %v2214 = vpop.f32.mrb[0].mxu0
        %v2215 = vpop.f32.mrb[0].mxu0
        %2216 = vmatprep.mubr.bf16.mxu0 0
        %2217 = vmatmul.mubr.bf16.gmra.mrb[0].mxu0 %v1603
        %v2218 = vpop.f32.mrb[0].mxu0
        %v2219 = vadd.f32 0.0, %v2218
        %v2220 = vpop.f32.mrb[0].mxu0
        %v2221 = vpop.f32.mrb[0].mxu0
        %v2222 = vpop.f32.mrb[0].mxu0
        %2223 = vmatprep.mubr.bf16.mxu0 0
        %2224 = vmatmul.mubr.bf16.gmra.mrb[0].mxu0 %v1605
        %v2225 = vpop.f32.mrb[0].mxu0
        %v2226 = vadd.f32 0.0, %v2225
        %v2227 = vpop.f32.mrb[0].mxu0
        %v2228 = vpop.f32.mrb[0].mxu0
        %v2229 = vpop.f32.mrb[0].mxu0
        %2230 = vmatprep.mubr.bf16.mxu0 0
        %2231 = vmatmul.mubr.bf16.gmra.mrb[0].mxu0 %v1607
        %v2232 = vpop.f32.mrb[0].mxu0
        %v2233 = vadd.f32 0.0, %v2232
        %v2234 = vpop.f32.mrb[0].mxu0
        %v2235 = vpop.f32.mrb[0].mxu0
        %v2236 = vpop.f32.mrb[0].mxu0
        %2237 = vmatprep.mubr.bf16.mxu0 0
        %2238 = vmatmul.mubr.bf16.gmra.mrb[0].mxu0 %v1609
        %v2239 = vpop.f32.mrb[0].mxu0
        %v2240 = vadd.f32 0.0, %v2239
        %v2241 = vpop.f32.mrb[0].mxu0
        %v2242 = vpop.f32.mrb[0].mxu0
        %v2243 = vpop.f32.mrb[0].mxu0
        %2244 = vmatprep.mubr.bf16.mxu0 0
        %2245 = vmatmul.mubr.bf16.gmra.mrb[0].mxu0 %v1854
        %v2246 = vpop.f32.mrb[0].mxu0
        %v2247 = vadd.f32 0.0, %v2246
        %v2248 = vpop.f32.mrb[0].mxu0
        %v2249 = vpop.f32.mrb[0].mxu0
        %v2250 = vpop.f32.mrb[0].mxu0
        %2251 = vmatprep.mubr.bf16.mxu0 0
        %2252 = vmatmul.mubr.bf16.gmra.mrb[0].mxu0 %v689
        %v2253 = vpop.f32.mrb[0].mxu0
        %v2254 = vadd.f32 0.0, %v2253
        %v2255 = vpop.f32.mrb[0].mxu0
        %v2256 = vpop.f32.mrb[0].mxu0
        %v2257 = vpop.f32.mrb[0].mxu0
        %2258 = vdwg.mxu0
        %v2259 = vadd.f32 %v2159, %v2205
        %v2260 = vadd.f32 %v2160, %v2212
        %v2261 = vadd.f32 %v2161, %v2219
        %v2262 = vadd.f32 %v2162, %v2226
        %v2263 = vadd.f32 %v2163, %v2233
        %v2264 = vadd.f32 %v2164, %v2240
        %v2265 = vadd.f32 %v2165, %v2247
        %v2266 = vadd.f32 %v2166, %v2254
        %v2267 = vsel %vm502, %v509, %v508
        %v2269 = vsel %vm571, %v2267, 0
        %v2272 = vsel %vm596, %v251, 0
        %2274 = vmatprep.subr.bf16.mxu0 0
        %2275 = vmatpush1.bf16.msra.mxu0 %v2272
        %2276 = vmatprep.subr.bf16.mxu0 0
        %2277 = vmatpush1.bf16.msra.mxu0 0
        %2278 = vmatprep.subr.bf16.mxu0 0
        %2279 = vmatpush1.bf16.msra.mxu0 0
        %2280 = vmatprep.subr.bf16.mxu0 0
        %2281 = vmatpush1.bf16.msra.mxu0 0
        %2282 = vmatprep.subr.bf16.mxu0 0
        %2283 = vmatpush1.bf16.msra.mxu0 0
        %2284 = vmatprep.subr.bf16.mxu0 0
        %2285 = vmatpush1.bf16.msra.mxu0 0
        %2286 = vmatprep.subr.bf16.mxu0 0
        %2287 = vmatpush1.bf16.msra.mxu0 0
        %2288 = vmatprep.subr.bf16.mxu0 0
        %2289 = vmatpush1.bf16.msra.mxu0 0
        %2290 = vmatprep.subr.bf16.mxu0 0
        %2291 = vmatpush1.bf16.msra.mxu0 0
        %2292 = vmatprep.subr.bf16.mxu0 0
        %2293 = vmatpush1.bf16.msra.mxu0 0
        %2294 = vmatprep.subr.bf16.mxu0 0
        %2295 = vmatpush1.bf16.msra.mxu0 0
        %2296 = vmatprep.subr.bf16.mxu0 0
        %2297 = vmatpush1.bf16.msra.mxu0 0
        %2298 = vmatprep.subr.bf16.mxu0 0
        %2299 = vmatpush1.bf16.msra.mxu0 0
        %2300 = vmatprep.subr.bf16.mxu0 0
        %2301 = vmatpush1.bf16.msra.mxu0 0
        %2302 = vmatprep.subr.bf16.mxu0 0
        %2303 = vmatpush1.bf16.msra.mxu0 0
        %2304 = vmatprep.subr.bf16.mxu0 0
        %2305 = vmatpush1.bf16.msra.mxu0 0
        %2306 = vmatprep.mubr.bf16.mxu0 0
        %2307 = vmatmul.mubr.bf16.gmra.mrb[0].mxu0 %v1488
        %v2308 = vpop.f32.mrb[0].mxu0
        %v2309 = vadd.f32 0.0, %v2308
        %v2310 = vpop.f32.mrb[0].mxu0
        %v2311 = vpop.f32.mrb[0].mxu0
        %v2312 = vpop.f32.mrb[0].mxu0
        %2313 = vmatprep.mubr.bf16.mxu0 0
        %2314 = vmatmul.mubr.bf16.gmra.mrb[0].mxu0 %v1491
        %v2315 = vpop.f32.mrb[0].mxu0
        %v2316 = vadd.f32 0.0, %v2315
        %v2317 = vpop.f32.mrb[0].mxu0
        %v2318 = vpop.f32.mrb[0].mxu0
        %v2319 = vpop.f32.mrb[0].mxu0
        %2320 = vmatprep.mubr.bf16.mxu0 0
        %2321 = vmatmul.mubr.bf16.gmra.mrb[0].mxu0 %v1494
        %v2322 = vpop.f32.mrb[0].mxu0
        %v2323 = vadd.f32 0.0, %v2322
        %v2324 = vpop.f32.mrb[0].mxu0
        %v2325 = vpop.f32.mrb[0].mxu0
        %v2326 = vpop.f32.mrb[0].mxu0
        %2327 = vmatprep.mubr.bf16.mxu0 0
        %2328 = vmatmul.mubr.bf16.gmra.mrb[0].mxu0 %v1497
        %v2329 = vpop.f32.mrb[0].mxu0
        %v2330 = vadd.f32 0.0, %v2329
        %v2331 = vpop.f32.mrb[0].mxu0
        %v2332 = vpop.f32.mrb[0].mxu0
        %v2333 = vpop.f32.mrb[0].mxu0
        %2334 = vmatprep.mubr.bf16.mxu0 0
        %2335 = vmatmul.mubr.bf16.gmra.mrb[0].mxu0 %v1500
        %v2336 = vpop.f32.mrb[0].mxu0
        %v2337 = vadd.f32 0.0, %v2336
        %v2338 = vpop.f32.mrb[0].mxu0
        %v2339 = vpop.f32.mrb[0].mxu0
        %v2340 = vpop.f32.mrb[0].mxu0
        %2341 = vmatprep.mubr.bf16.mxu0 0
        %2342 = vmatmul.mubr.bf16.gmra.mrb[0].mxu0 %v1503
        %v2343 = vpop.f32.mrb[0].mxu0
        %v2344 = vadd.f32 0.0, %v2343
        %v2345 = vpop.f32.mrb[0].mxu0
        %v2346 = vpop.f32.mrb[0].mxu0
        %v2347 = vpop.f32.mrb[0].mxu0
        %2348 = vmatprep.mubr.bf16.mxu0 0
        %2349 = vmatmul.mubr.bf16.gmra.mrb[0].mxu0 %v1961
        %v2350 = vpop.f32.mrb[0].mxu0
        %v2351 = vadd.f32 0.0, %v2350
        %v2352 = vpop.f32.mrb[0].mxu0
        %v2353 = vpop.f32.mrb[0].mxu0
        %v2354 = vpop.f32.mrb[0].mxu0
        %2355 = vmatprep.mubr.bf16.mxu0 0
        %2356 = vmatmul.mubr.bf16.gmra.mrb[0].mxu0 %v2269
        %v2357 = vpop.f32.mrb[0].mxu0
        %v2358 = vadd.f32 0.0, %v2357
        %v2359 = vpop.f32.mrb[0].mxu0
        %v2360 = vpop.f32.mrb[0].mxu0
        %v2361 = vpop.f32.mrb[0].mxu0
        %2362 = vdwg.mxu0
        %v2363 = vadd.f32 %v2259, %v2309
        %v2364 = vadd.f32 %v2260, %v2316
        %v2365 = vadd.f32 %v2261, %v2323
        %v2366 = vadd.f32 %v2262, %v2330
        %v2367 = vadd.f32 %v2263, %v2337
        %v2368 = vadd.f32 %v2264, %v2344
        %v2369 = vadd.f32 %v2265, %v2351
        %v2370 = vadd.f32 %v2266, %v2358
        %v2371 = vsel %vm1712, %v1713, %v1713
        %v2373 = vsel %vm571, %v2371, 0
        %v2376 = vsel %vm596, %v253, 0
        %2378 = vmatprep.subr.bf16.mxu0 0
        %2379 = vmatpush1.bf16.msra.mxu0 %v2376
        %2380 = vmatprep.subr.bf16.mxu0 0
        %2381 = vmatpush1.bf16.msra.mxu0 0
        %2382 = vmatprep.subr.bf16.mxu0 0
        %2383 = vmatpush1.bf16.msra.mxu0 0
        %2384 = vmatprep.subr.bf16.mxu0 0
        %2385 = vmatpush1.bf16.msra.mxu0 0
        %2386 = vmatprep.subr.bf16.mxu0 0
        %2387 = vmatpush1.bf16.msra.mxu0 0
        %2388 = vmatprep.subr.bf16.mxu0 0
        %2389 = vmatpush1.bf16.msra.mxu0 0
        %2390 = vmatprep.subr.bf16.mxu0 0
        %2391 = vmatpush1.bf16.msra.mxu0 0
        %2392 = vmatprep.subr.bf16.mxu0 0
        %2393 = vmatpush1.bf16.msra.mxu0 0
        %2394 = vmatprep.subr.bf16.mxu0 0
        %2395 = vmatpush1.bf16.msra.mxu0 0
        %2396 = vmatprep.subr.bf16.mxu0 0
        %2397 = vmatpush1.bf16.msra.mxu0 0
        %2398 = vmatprep.subr.bf16.mxu0 0
        %2399 = vmatpush1.bf16.msra.mxu0 0
        %2400 = vmatprep.subr.bf16.mxu0 0
        %2401 = vmatpush1.bf16.msra.mxu0 0
        %2402 = vmatprep.subr.bf16.mxu0 0
        %2403 = vmatpush1.bf16.msra.mxu0 0
        %2404 = vmatprep.subr.bf16.mxu0 0
        %2405 = vmatpush1.bf16.msra.mxu0 0
        %2406 = vmatprep.subr.bf16.mxu0 0
        %2407 = vmatpush1.bf16.msra.mxu0 0
        %2408 = vmatprep.subr.bf16.mxu0 0
        %2409 = vmatpush1.bf16.msra.mxu0 0
        %2410 = vmatprep.mubr.bf16.mxu0 0
        %2411 = vmatmul.mubr.bf16.gmra.mrb[0].mxu0 %v1737
        %v2412 = vpop.f32.mrb[0].mxu0
        %v2413 = vadd.f32 0.0, %v2412
        %v2414 = vpop.f32.mrb[0].mxu0
        %v2415 = vpop.f32.mrb[0].mxu0
        %v2416 = vpop.f32.mrb[0].mxu0
        %2417 = vmatprep.mubr.bf16.mxu0 0
        %2418 = vmatmul.mubr.bf16.gmra.mrb[0].mxu0 %v1740
        %v2419 = vpop.f32.mrb[0].mxu0
        %v2420 = vadd.f32 0.0, %v2419
        %v2421 = vpop.f32.mrb[0].mxu0
        %v2422 = vpop.f32.mrb[0].mxu0
        %v2423 = vpop.f32.mrb[0].mxu0
        %2424 = vmatprep.mubr.bf16.mxu0 0
        %2425 = vmatmul.mubr.bf16.gmra.mrb[0].mxu0 %v1743
        %v2426 = vpop.f32.mrb[0].mxu0
        %v2427 = vadd.f32 0.0, %v2426
        %v2428 = vpop.f32.mrb[0].mxu0
        %v2429 = vpop.f32.mrb[0].mxu0
        %v2430 = vpop.f32.mrb[0].mxu0
        %2431 = vmatprep.mubr.bf16.mxu0 0
        %2432 = vmatmul.mubr.bf16.gmra.mrb[0].mxu0 %v1746
        %v2433 = vpop.f32.mrb[0].mxu0
        %v2434 = vadd.f32 0.0, %v2433
        %v2435 = vpop.f32.mrb[0].mxu0
        %v2436 = vpop.f32.mrb[0].mxu0
        %v2437 = vpop.f32.mrb[0].mxu0
        %2438 = vmatprep.mubr.bf16.mxu0 0
        %2439 = vmatmul.mubr.bf16.gmra.mrb[0].mxu0 %v1749
        %v2440 = vpop.f32.mrb[0].mxu0
        %v2441 = vadd.f32 0.0, %v2440
        %v2442 = vpop.f32.mrb[0].mxu0
        %v2443 = vpop.f32.mrb[0].mxu0
        %v2444 = vpop.f32.mrb[0].mxu0
        %2445 = vmatprep.mubr.bf16.mxu0 0
        %2446 = vmatmul.mubr.bf16.gmra.mrb[0].mxu0 %v1752
        %v2447 = vpop.f32.mrb[0].mxu0
        %v2448 = vadd.f32 0.0, %v2447
        %v2449 = vpop.f32.mrb[0].mxu0
        %v2450 = vpop.f32.mrb[0].mxu0
        %v2451 = vpop.f32.mrb[0].mxu0
        %2452 = vmatprep.mubr.bf16.mxu0 0
        %2453 = vmatmul.mubr.bf16.gmra.mrb[0].mxu0 %v2065
        %v2454 = vpop.f32.mrb[0].mxu0
        %v2455 = vadd.f32 0.0, %v2454
        %v2456 = vpop.f32.mrb[0].mxu0
        %v2457 = vpop.f32.mrb[0].mxu0
        %v2458 = vpop.f32.mrb[0].mxu0
        %2459 = vmatprep.mubr.bf16.mxu0 0
        %2460 = vmatmul.mubr.bf16.gmra.mrb[0].mxu0 %v2373
        %v2461 = vpop.f32.mrb[0].mxu0
        %v2462 = vadd.f32 0.0, %v2461
        %v2463 = vpop.f32.mrb[0].mxu0
        %v2464 = vpop.f32.mrb[0].mxu0
        %v2465 = vpop.f32.mrb[0].mxu0
        %2466 = vdwg.mxu0
        %v2467 = vadd.f32 %v2363, %v2413
        %v2468 = vadd.f32 %v2364, %v2420
        %v2469 = vadd.f32 %v2365, %v2427
        %v2470 = vadd.f32 %v2366, %v2434
        %v2471 = vadd.f32 %v2367, %v2441
        %v2472 = vadd.f32 %v2368, %v2448
        %v2473 = vadd.f32 %v2369, %v2455
        %v2474 = vadd.f32 %v2370, %v2462
        %v2476 = vlaneseq
        %v2477 = vshrl.u32 %v2476, 7
        %v2478 = vsub.s32 0, %v2477
        %v2479 = vrot.slane %v225, %v2478
        %v2481 = vadd.f32 %v2467, %v2479
        %v2482 = vadd.f32 %v2468, %v2479
        %v2483 = vadd.f32 %v2469, %v2479
        %v2484 = vadd.f32 %v2470, %v2479
        %v2485 = vadd.f32 %v2471, %v2479
        %v2486 = vadd.f32 %v2472, %v2479
        %v2487 = vadd.f32 %v2473, %v2479
        %v2488 = vadd.f32 %v2474, %v2479
        %v2489 = vadd.f32 %v2481, %v312
        %v2490 = vadd.f32 %v2482, %v313
        %v2491 = vadd.f32 %v2483, %v314
        %v2492 = vadd.f32 %v2484, %v315
        %v2493 = vadd.f32 %v2485, %v316
        %v2494 = vadd.f32 %v2486, %v317
        %v2495 = vadd.f32 %v2487, %v318
        %v2496 = vadd.f32 %v2488, %v319
        %v2497 = vmax.f32 %v2489, 0.0
        %v2498 = vmax.f32 %v2490, 0.0
        %v2499 = vmax.f32 %v2491, 0.0
        %v2500 = vmax.f32 %v2492, 0.0
        %v2501 = vmax.f32 %v2493, 0.0
        %v2502 = vmax.f32 %v2494, 0.0
        %v2503 = vmax.f32 %v2495, 0.0
        %v2504 = vmax.f32 %v2496, 0.0
        %2505 = vst.msk [vmem:[%s217] sm:$0xff] %vm571, %v2497
        %2506 = vst.msk [vmem:[%s217 + $0x8] sm:$0xff] %vm571, %v2498
        %2507 = vst.msk [vmem:[%s217 + $0x10] sm:$0xff] %vm571, %v2499
        %2508 = vst.msk [vmem:[%s217 + $0x18] sm:$0xff] %vm571, %v2500
        %2509 = vst.msk [vmem:[%s217 + $0x20] sm:$0xff] %vm571, %v2501
        %2510 = vst.msk [vmem:[%s217 + $0x28] sm:$0xff] %vm571, %v2502
        %2511 = vst.msk [vmem:[%s217 + $0x30] sm:$0xff] %vm571, %v2503
        %2512 = vst.msk [vmem:[%s217 + $0x38] sm:$0xff] %vm571, %v2504
        %s2513 = sand.u32 %s137, 1
        %s2514 = scalar_lea.sflag [#allocation3], %s2513
        %s2515 = sand.u32 %s137, 1
        %s2516 = smul.addr %s2515, 64
        %s2517 = scalar_lea.vmem [#allocation2], %s2516
        // Predicated region
        $region41: #{a_call__.1} parent=39 // pred_check
          %p2518 = pneg %p147
        $region42: #{a_call__.1} parent=39 // pred_check_branch
          %2520 = sbr.rel (%p2518) target = $region44
        $region43: #{a_call__.1} parent=39 // pred_region
          %s2522 = ssub.s32 1024, 1024
          %2523 = vsyncadd %s2514, %s2522
          %s2524 = smul.addr %s19, 8
          %s2525 = smul.addr %s2524, 128
          %s2526 = scalar_lea.hbm %s5, %s2525
          %s2527 = sshll.u32 %s2517, 4
          %s2528 = int_to_ptr.vmem [resolvable:$true] %s2527
          %2533 = dma.vmem_to_hbm [thread:$0]  %s2528, 1024, %s2526, %s2514, 128, 128, 8
        $region44: #{a_call__.1} parent=39 // pred_fallthru
          _
      $region40: #{a_call__.1} parent=5 // pred_fallthru
        _
      %p2534 = scmp.le.s32.totalorder 2, %s14
      // Predicated region
      $region45: #{a_call__.1} parent=5 // pred_check
        %p2535 = pneg %p2534
      $region46: #{a_call__.1} parent=5 // pred_check_branch
        %2537 = sbr.rel (%p2535) target = $region48
      $region47: #{a_call__.1} parent=5 // pred_region
        %s2538 = ssub.s32 %s14, 2
        // Predicated region
        $region49: #{a_call__.1} parent=47 // pred_check
          %p2539 = pneg %p153
        $region50: #{a_call__.1} parent=47 // pred_check_branch
          %2541 = sbr.rel (%p2539) target = $region52
        $region51: #{a_call__.1} parent=47 // pred_region
          %s2542 = sand.u32 %s138, 1
          %s2543 = scalar_lea.sflag [#allocation3], %s2542
          %s2544 = sand.u32 %s138, 1
          %s2545 = smul.addr %s2544, 64
          %s2546 = scalar_lea.vmem [#allocation2], %s2545
          %2547 = dma.done %s2543, 1024
        $region52: #{a_call__.1} parent=47 // pred_fallthru
          _
      $region48: #{a_call__.1} parent=5 // pred_fallthru
        _
    $region6: #{a_call__.1} parent=1 // loop_footer
      %s18 = sadd.s32 1, %s14
    $region7: #{a_call__.1} parent=1 // loop_footer_branch
      %13 = sbr.rel target = $region3
    $region8: #{a_call__.1} parent=1 // loop_exit
      _
    %2548 = vsyncpa [#allocation3], 1
    %s2549 = scalar_lea.sflag [#allocation3], 1
    %2550 = vsyncpa %s2549, 1

</llo_original>
